<compile_context>
chip_gen: v7x
topology: tpu7x:2x2x1
jax: 0.10.0
libtpu: 0.0.40
codegen_flags: <defaults>
</compile_context>

<pallas_src>
import functools

import jax
import jax.numpy as jnp
from jax.experimental import pallas as pl
from jax.experimental.pallas import tpu as pltpu

# Make the pure-JAX reference (and the in-kernel f32 dots) true-f32 so the
# exactness check is meaningful on TPU.
jax.config.update("jax_default_matmul_precision", "highest")


# ----------------------------------------------------------------------------
# helpers
# ----------------------------------------------------------------------------
def _round_up(n, m):
    return ((n + m - 1) // m) * m


def _silu_f32(z):
    # Keep elementwise math in f32 (v5e VPU/EUP have no bf16 path).
    return z * jax.nn.sigmoid(z)


def _choose_batch_tile(B, max_tile=512):
    """Pick (TB, B_pad): tiles <= max_tile rows, >= 2 tiles when B is big enough
    to feed both v7x TensorCores, minimal 8-row-rounding waste."""
    n_tiles = max(1, -(-B // max_tile))
    if B >= 16:
        n_tiles = max(n_tiles, 2)          # megacore: give both TCs work (v7x)
    TB = _round_up(-(-B // n_tiles), 8)
    B_pad = _round_up(B, TB)
    return TB, B_pad


# ----------------------------------------------------------------------------
# kernels
# ----------------------------------------------------------------------------
def vector_field_kernel(x_ref, t_ref, w1x_ref, w1t_ref, b1_ref,
                        w2_ref, b2_ref, w3_ref, b3_ref, out_ref):
    """One VectorField evaluation on a (TB, D) batch tile.

    The time input is a rank-1 update of the layer-1 pre-activation:
    cat([x, t]) @ W1 == x @ W1[:D] + t * W1[D], so no concatenated/padded
    input tile is ever built.
    """
    x = x_ref[...]
    t = t_ref[...]                                           # (TB, 1) f32
    h1 = jnp.dot(x.astype(w1x_ref.dtype), w1x_ref[...],
                 preferred_element_type=jnp.float32)
    h1 = _silu_f32(h1 + t * w1t_ref[...] + b1_ref[...])
    h2 = jnp.dot(h1.astype(w2_ref.dtype), w2_ref[...],
                 preferred_element_type=jnp.float32)
    h2 = _silu_f32(h2 + b2_ref[...])
    v = jnp.dot(h2.astype(w3_ref.dtype), w3_ref[...],
                preferred_element_type=jnp.float32) + b3_ref[...]
    out_ref[...] = v.astype(out_ref.dtype)


def euler_kernel(x_ref, w1x_ref, w1t_ref, b1_ref, w2_ref, b2_ref,
                 w3_ref, b3_ref, out_ref, *, num_steps):
    """Fused Euler sampler: num_steps vector-field evals in one pallas_call.

    Weights stay resident in VMEM for the whole loop; the per-step scalar time
    t_k = k / num_steps folds into the layer-1 bias (b1 + t_k * W1[D, :]), so
    the loop-carried state is just the (TB, D) sample itself (no time column,
    no mask).
    """
    dt = jnp.float32(1.0 / num_steps)
    TB, D = x_ref.shape
    H_pad = b1_ref.shape[-1]

    w1x = w1x_ref[...]
    w2 = w2_ref[...]
    w3 = w3_ref[...]
    # Hoist bias / time-row broadcasts out of the hot loop (JAX does not CSE
    # broadcast_in_dim; leaving `+ b` in the body re-emits it every step).
    b1b = jnp.broadcast_to(b1_ref[...], (TB, H_pad))
    w1tb = jnp.broadcast_to(w1t_ref[...], (TB, H_pad))
    b2b = jnp.broadcast_to(b2_ref[...], (TB, H_pad))
    b3b = jnp.broadcast_to(b3_ref[...], (TB, D))

    def body(k, x):
        t_k = k.astype(jnp.float32) * dt
        h1 = jnp.dot(x.astype(w1x.dtype), w1x,
                     preferred_element_type=jnp.float32)
        h1 = _silu_f32(h1 + b1b + t_k * w1tb)
        h2 = jnp.dot(h1.astype(w2.dtype), w2,
                     preferred_element_type=jnp.float32)
        h2 = _silu_f32(h2 + b2b)
        v = jnp.dot(h2.astype(w3.dtype), w3,
                    preferred_element_type=jnp.float32) + b3b
        return x + dt * v

    # Short static trip count: unroll so the LLO scheduler can interleave
    # MXU pushes, EUP sigmoids and loads/stores across steps.
    x = jax.lax.fori_loop(0, num_steps, body,
                          x_ref[...].astype(jnp.float32), unroll=True)
    out_ref[...] = x.astype(out_ref.dtype)


# ----------------------------------------------------------------------------
# parameters
# ----------------------------------------------------------------------------
def init_params(key, input_dim, hidden_dim):
    """Synthetic weights in (in_features, out_features) layout (== W^T of nn.Linear)."""
    ks = jax.random.split(key, 6)
    s1 = 1.0 / jnp.sqrt(input_dim + 1.0)
    s2 = 1.0 / jnp.sqrt(float(hidden_dim))
    w1 = jax.random.uniform(ks[0], (input_dim + 1, hidden_dim),
                            minval=-s1, maxval=s1, dtype=jnp.float32)
    b1 = jax.random.uniform(ks[1], (1, hidden_dim),
                            minval=-s1, maxval=s1, dtype=jnp.float32)
    w2 = jax.random.uniform(ks[2], (hidden_dim, hidden_dim),
                            minval=-s2, maxval=s2, dtype=jnp.float32)
    b2 = jax.random.uniform(ks[3], (1, hidden_dim),
                            minval=-s2, maxval=s2, dtype=jnp.float32)
    w3 = jax.random.uniform(ks[4], (hidden_dim, input_dim),
                            minval=-s2, maxval=s2, dtype=jnp.float32)
    b3 = jax.random.uniform(ks[5], (1, input_dim),
                            minval=-s2, maxval=s2, dtype=jnp.float32)
    return (w1, b1, w2, b2, w3, b3)


def prepare_params(full_params, input_dim, hidden_dim, weight_dtype=jnp.bfloat16):
    """Split W1 into its x rows and its time row; zero-pad the hidden dim only.

    Padding is exact: SiLU(0) = 0 and padded weight rows/cols are 0.  Weights
    default to bf16 (MXU-native); biases / time row stay f32 (VPU adds).
    x / out keep their true width D (no feature padding in HBM).
    """
    w1, b1, w2, b2, w3, b3 = full_params
    D, H = input_dim, hidden_dim
    # 128-lane alignment; 256 multiples once H > 128 to fill the 2x256^2 MXU
    # of v6e/v7x (no-op for the module default H=768).
    H_pad = _round_up(H, 256) if H > 128 else _round_up(H, 128)

    w1xp = jnp.zeros((D, H_pad), weight_dtype).at[:, :H].set(
        w1[:D].astype(weight_dtype))
    w1tp = jnp.zeros((1, H_pad), jnp.float32).at[:, :H].set(w1[D:D + 1])
    b1p = jnp.zeros((1, H_pad), jnp.float32).at[:, :H].set(b1)
    w2p = jnp.zeros((H_pad, H_pad), weight_dtype).at[:H, :H].set(
        w2.astype(weight_dtype))
    b2p = jnp.zeros((1, H_pad), jnp.float32).at[:, :H].set(b2)
    w3p = jnp.zeros((H_pad, D), weight_dtype).at[:H, :].set(
        w3.astype(weight_dtype))
    b3p = b3.astype(jnp.float32)
    return (w1xp, w1tp, b1p, w2p, b2p, w3p, b3p)


# ----------------------------------------------------------------------------
# pallas_call builders / wrappers
# ----------------------------------------------------------------------------
def _build_call(kernel_fn, B_pad, TB, D, H_pad, weight_dtype, has_t, num_evals=1):
    grid = (B_pad // TB,)
    row_spec = pl.BlockSpec((TB, D), lambda i: (i, 0))

    def const(shape):
        # Constant index_map: block index never changes, so Pallas skips the
        # re-DMA and the weights stay resident in VMEM across batch tiles.
        return pl.BlockSpec(shape, lambda i: (0, 0))

    in_specs = [row_spec]
    if has_t:
        in_specs.append(pl.BlockSpec((TB, 1), lambda i: (i, 0)))
    in_specs += [const((D, H_pad)), const((1, H_pad)), const((1, H_pad)),
                 const((H_pad, H_pad)), const((1, H_pad)),
                 const((H_pad, D)), const((1, D))]

    wbytes = jnp.dtype(weight_dtype).itemsize
    weight_bytes = (D * H_pad + H_pad * H_pad + H_pad * D) * wbytes
    bias_bytes = (3 * H_pad + D) * 4
    flops = int(2 * B_pad * (D * H_pad + H_pad * H_pad + H_pad * D) * num_evals)
    cost = pl.CostEstimate(
        flops=flops,
        transcendentals=int(2 * B_pad * H_pad * num_evals),
        bytes_accessed=int(4 * (2 * B_pad * D + B_pad) + weight_bytes + bias_bytes),
    )

    # Explicit VMEM budget: double-buffered IO tiles + (double-buffered) resident
    # weights + f32 working set, with headroom; capped below v7x's 64 MiB.
    est = (2 * weight_bytes + bias_bytes
           + 2 * 2 * (TB * D + TB) * 4
           + 4 * TB * H_pad * 4)
    vmem_limit = int(min(56 * 1024 * 1024, max(32 * 1024 * 1024, 2 * est)))

    return pl.pallas_call(
        kernel_fn,
        out_shape=jax.ShapeDtypeStruct((B_pad, D), jnp.float32),
        grid=grid,
        in_specs=in_specs,
        out_specs=row_spec,
        compiler_params=pltpu.CompilerParams(
            dimension_semantics=("parallel",),        # megacore-shard batch (v7x)
            vmem_limit_bytes=vmem_limit),
        cost_estimate=cost,
    )


def vector_field_forward(x, t, params):
    """x: (B, ...) -> flattened to (B, D); t: (B,).  == PyTorch VectorField.forward."""
    w1xp, w1tp, b1p, w2p, b2p, w3p, b3p = params
    orig_shape = x.shape
    B = x.shape[0]
    x2 = x.reshape(B, -1).astype(jnp.float32)
    D = x2.shape[1]
    H_pad = b1p.shape[-1]

    TB, B_pad = _choose_batch_tile(B, max_tile=1024)
    t2 = t.reshape(B, 1).astype(jnp.float32)
    if B_pad != B:
        # Batch-only zero pad; the feature dim is never padded in HBM.
        x2 = jnp.pad(x2, ((0, B_pad - B), (0, 0)))
        t2 = jnp.pad(t2, ((0, B_pad - B), (0, 0)))

    call = _build_call(vector_field_kernel, B_pad, TB, D, H_pad,
                       w1xp.dtype, has_t=True)
    out = call(x2, t2, w1xp, w1tp, b1p, w2p, b2p, w3p, b3p)
    if B_pad != B:
        out = out[:B]
    return out.reshape(orig_shape)


def euler_sample(x0, params, num_steps):
    """x_{k+1} = x_k + (1/N) * v(x_k, k/N); all N steps fused in one pallas_call."""
    w1xp, w1tp, b1p, w2p, b2p, w3p, b3p = params
    orig_shape = x0.shape
    B = x0.shape[0]
    x2 = x0.reshape(B, -1).astype(jnp.float32)
    D = x2.shape[1]
    H_pad = b1p.shape[-1]

    TB, B_pad = _choose_batch_tile(B, max_tile=512)
    if B_pad != B:
        x2 = jnp.pad(x2, ((0, B_pad - B), (0, 0)))

    kernel = functools.partial(euler_kernel, num_steps=num_steps)
    call = _build_call(kernel, B_pad, TB, D, H_pad, w1xp.dtype,
                       has_t=False, num_evals=num_steps)
    out = call(x2, w1xp, w1tp, b1p, w2p, b2p, w3p, b3p)
    if B_pad != B:
        out = out[:B]
    return out.reshape(orig_shape)


# ----------------------------------------------------------------------------
# pure-JAX references
# ----------------------------------------------------------------------------
def reference_forward(x, t, full_params):
    w1, b1, w2, b2, w3, b3 = full_params
    x_t = jnp.concatenate([x.reshape(x.shape[0], -1), t.reshape(-1, 1)], axis=-1)
    h1 = jax.nn.silu(x_t @ w1 + b1)
    h2 = jax.nn.silu(h1 @ w2 + b2)
    return (h2 @ w3 + b3).reshape(x.shape)


def reference_euler(x0, full_params, num_steps):
    dt = 1.0 / num_steps
    x = x0
    for k in range(num_steps):
        t = jnp.full((x.shape[0],), k * dt, jnp.float32)
        x = x + dt * reference_forward(x, t, full_params)
    return x


# ----------------------------------------------------------------------------
# main
# ----------------------------------------------------------------------------
if __name__ == "__main__":
    B, D, H = 16, 16, 32   # batch, input_dim (flattened), hidden_dim (small test)

    key = jax.random.PRNGKey(0)
    kx, kt, kp = jax.random.split(key, 3)
    x = jax.random.normal(kx, (B, D), dtype=jnp.float32)
    t = jax.random.uniform(kt, (B,), dtype=jnp.float32)
    full_params = init_params(kp, D, H)

    # --- f32 weights: exactness check against the pure-JAX reference ---
    params_f32 = prepare_params(full_params, D, H, weight_dtype=jnp.float32)
    v = vector_field_forward(x, t, params_f32)
    jax.block_until_ready(v)
    v_ref = reference_forward(x, t, full_params)
    assert v.shape == (B, D)
    assert jnp.allclose(v, v_ref, rtol=1e-4, atol=1e-4), "f32 forward mismatch"

    # --- default bf16 weights (MXU-native fast path), loose tolerance ---
    params_bf16 = prepare_params(full_params, D, H)   # bf16 by default
    v_bf16 = vector_field_forward(x, t, params_bf16)
    jax.block_until_ready(v_bf16)
    assert jnp.allclose(v_bf16, v_ref, rtol=5e-2, atol=5e-2), "bf16 forward mismatch"

    # --- ragged batch: exercises the batch-only pad + slice path ---
    v_ragged = vector_field_forward(x[:10], t[:10], params_f32)
    jax.block_until_ready(v_ragged)
    assert jnp.allclose(v_ragged, v_ref[:10], rtol=1e-4, atol=1e-4), "ragged batch mismatch"

    # --- fused multi-step Euler sampler (weights resident across all steps) ---
    num_steps = 8
    xs = euler_sample(x, params_f32, num_steps=num_steps)
    jax.block_until_ready(xs)
    xs_ref = reference_euler(x, full_params, num_steps)
    assert jnp.allclose(xs, xs_ref, rtol=1e-3, atol=1e-3), "euler sampler mismatch"

    xs_bf16 = euler_sample(x, params_bf16, num_steps=num_steps)
    jax.block_until_ready(xs_bf16)
    assert xs_bf16.shape == (B, D) and bool(jnp.all(jnp.isfinite(xs_bf16)))

    print("KERNEL_OK")
</pallas_src>

<mosaic_0001>
module attributes {stable_mosaic.version = 11 : i64} {
  func.func @vector_field_kernel(%arg0: i32, %arg1: memref<8x16xf32, #tpu.memory_space<vmem>>, %arg2: memref<8x1xf32, #tpu.memory_space<vmem>>, %arg3: memref<16x128xf32, #tpu.memory_space<vmem>>, %arg4: memref<1x128xf32, #tpu.memory_space<vmem>>, %arg5: memref<1x128xf32, #tpu.memory_space<vmem>>, %arg6: memref<128x128xf32, #tpu.memory_space<vmem>>, %arg7: memref<1x128xf32, #tpu.memory_space<vmem>>, %arg8: memref<128x16xf32, #tpu.memory_space<vmem>>, %arg9: memref<1x16xf32, #tpu.memory_space<vmem>>, %arg10: memref<8x16xf32, #tpu.memory_space<vmem>>) attributes {dimension_semantics = [#tpu.dimension_semantics<parallel>], iteration_bounds = array<i64: 2>, scalar_prefetch = 0 : i64, scratch_operands = 0 : i64, tpu.core_type = #tpu.core_type<tc>, window_params = [{transform_indices = @transform_0, window_bounds = array<i64: 8, 16>}, {transform_indices = @transform_1, window_bounds = array<i64: 8, 1>}, {pipeline_mode = #tpu.pipeline_mode<synchronous>, transform_indices = @transform_2, window_bounds = array<i64: 16, 128>}, {pipeline_mode = #tpu.pipeline_mode<synchronous>, transform_indices = @transform_3, window_bounds = array<i64: 1, 128>}, {pipeline_mode = #tpu.pipeline_mode<synchronous>, transform_indices = @transform_4, window_bounds = array<i64: 1, 128>}, {pipeline_mode = #tpu.pipeline_mode<synchronous>, transform_indices = @transform_5, window_bounds = array<i64: 128, 128>}, {pipeline_mode = #tpu.pipeline_mode<synchronous>, transform_indices = @transform_6, window_bounds = array<i64: 1, 128>}, {pipeline_mode = #tpu.pipeline_mode<synchronous>, transform_indices = @transform_7, window_bounds = array<i64: 128, 16>}, {pipeline_mode = #tpu.pipeline_mode<synchronous>, transform_indices = @transform_8, window_bounds = array<i64: 1, 16>}, {transform_indices = @transform_9, window_bounds = array<i64: 8, 16>}]} {
    %c0 = arith.constant 0 : index
    %c0_0 = arith.constant 0 : index
    %0 = vector.load %arg1[%c0, %c0_0] : memref<8x16xf32, #tpu.memory_space<vmem>>, vector<8x16xf32>
    %c0_1 = arith.constant 0 : index
    %c0_2 = arith.constant 0 : index
    %1 = vector.load %arg2[%c0_1, %c0_2] : memref<8x1xf32, #tpu.memory_space<vmem>>, vector<8x1xf32>
    %c0_3 = arith.constant 0 : index
    %c0_4 = arith.constant 0 : index
    %2 = vector.load %arg3[%c0_3, %c0_4] : memref<16x128xf32, #tpu.memory_space<vmem>>, vector<16x128xf32>
    %cst = arith.constant dense<0.000000e+00> : vector<8x128xf32>
    %3 = tpu.matmul %0, %2, %cst {dimension_numbers = #tpu.dot_dimension_numbers<[1], [0], [0], [1], [0, 0, 1, 1], [], []>, precision = #tpu.contract_precision<fp32>} : vector<8x16xf32>, vector<16x128xf32>, vector<8x128xf32> -> vector<8x128xf32>
    %c0_5 = arith.constant 0 : index
    %c0_6 = arith.constant 0 : index
    %4 = vector.load %arg4[%c0_5, %c0_6] : memref<1x128xf32, #tpu.memory_space<vmem>>, vector<1x128xf32>
    %5 = vector.broadcast %1 : vector<8x1xf32> to vector<8x128xf32>
    %6 = vector.broadcast %4 : vector<1x128xf32> to vector<8x128xf32>
    %7 = arith.mulf %5, %6 : vector<8x128xf32>
    %8 = arith.addf %3, %7 : vector<8x128xf32>
    %c0_7 = arith.constant 0 : index
    %c0_8 = arith.constant 0 : index
    %9 = vector.load %arg5[%c0_7, %c0_8] : memref<1x128xf32, #tpu.memory_space<vmem>>, vector<1x128xf32>
    %10 = vector.broadcast %9 : vector<1x128xf32> to vector<8x128xf32>
    %11 = arith.addf %8, %10 : vector<8x128xf32>
    %12 = arith.negf %11 : vector<8x128xf32>
    %13 = math.exp %12 : vector<8x128xf32>
    %cst_9 = arith.constant 1.000000e+00 : f32
    %14 = vector.broadcast %cst_9 : f32 to vector<8x128xf32>
    %15 = arith.addf %14, %13 : vector<8x128xf32>
    %16 = arith.divf %14, %15 : vector<8x128xf32>
    %17 = arith.mulf %11, %16 : vector<8x128xf32>
    %c0_10 = arith.constant 0 : index
    %c0_11 = arith.constant 0 : index
    %18 = vector.load %arg6[%c0_10, %c0_11] : memref<128x128xf32, #tpu.memory_space<vmem>>, vector<128x128xf32>
    %cst_12 = arith.constant dense<0.000000e+00> : vector<8x128xf32>
    %19 = tpu.matmul %17, %18, %cst_12 {dimension_numbers = #tpu.dot_dimension_numbers<[1], [0], [0], [1], [0, 0, 1, 1], [], []>, precision = #tpu.contract_precision<fp32>} : vector<8x128xf32>, vector<128x128xf32>, vector<8x128xf32> -> vector<8x128xf32>
    %c0_13 = arith.constant 0 : index
    %c0_14 = arith.constant 0 : index
    %20 = vector.load %arg7[%c0_13, %c0_14] : memref<1x128xf32, #tpu.memory_space<vmem>>, vector<1x128xf32>
    %21 = vector.broadcast %20 : vector<1x128xf32> to vector<8x128xf32>
    %22 = arith.addf %19, %21 : vector<8x128xf32>
    %23 = arith.negf %22 : vector<8x128xf32>
    %24 = math.exp %23 : vector<8x128xf32>
    %cst_15 = arith.constant 1.000000e+00 : f32
    %25 = vector.broadcast %cst_15 : f32 to vector<8x128xf32>
    %26 = arith.addf %25, %24 : vector<8x128xf32>
    %27 = arith.divf %25, %26 : vector<8x128xf32>
    %28 = arith.mulf %22, %27 : vector<8x128xf32>
    %c0_16 = arith.constant 0 : index
    %c0_17 = arith.constant 0 : index
    %29 = vector.load %arg8[%c0_16, %c0_17] : memref<128x16xf32, #tpu.memory_space<vmem>>, vector<128x16xf32>
    %cst_18 = arith.constant dense<0.000000e+00> : vector<8x16xf32>
    %30 = tpu.matmul %28, %29, %cst_18 {dimension_numbers = #tpu.dot_dimension_numbers<[1], [0], [0], [1], [0, 0, 1, 1], [], []>, precision = #tpu.contract_precision<fp32>} : vector<8x128xf32>, vector<128x16xf32>, vector<8x16xf32> -> vector<8x16xf32>
    %c0_19 = arith.constant 0 : index
    %c0_20 = arith.constant 0 : index
    %31 = vector.load %arg9[%c0_19, %c0_20] : memref<1x16xf32, #tpu.memory_space<vmem>>, vector<1x16xf32>
    %32 = vector.broadcast %31 : vector<1x16xf32> to vector<8x16xf32>
    %33 = arith.addf %30, %32 : vector<8x16xf32>
    %c0_21 = arith.constant 0 : index
    %c0_22 = arith.constant 0 : index
    %34 = vector.load %arg10[%c0_21, %c0_22] : memref<8x16xf32, #tpu.memory_space<vmem>>, vector<8x16xf32>
    tpu.vector_store %arg10[%c0_21, %c0_22], %33 {strides = array<i32>} : memref<8x16xf32, #tpu.memory_space<vmem>>, vector<8x16xf32>,
    return
  }
  func.func @transform_0(%arg0: i32) -> (i32, i32) {
    %c0_i32 = arith.constant 0 : i32
    %c0_i32_0 = arith.constant 0 : i32
    return %arg0, %c0_i32 : i32, i32
  }
  func.func @transform_1(%arg0: i32) -> (i32, i32) {
    %c0_i32 = arith.constant 0 : i32
    %c0_i32_0 = arith.constant 0 : i32
    return %arg0, %c0_i32 : i32, i32
  }
  func.func @transform_2(%arg0: i32) -> (i32, i32) {
    %c0_i32 = arith.constant 0 : i32
    %c0_i32_0 = arith.constant 0 : i32
    %c0_i32_1 = arith.constant 0 : i32
    return %c0_i32, %c0_i32_0 : i32, i32
  }
  func.func @transform_3(%arg0: i32) -> (i32, i32) {
    %c0_i32 = arith.constant 0 : i32
    %c0_i32_0 = arith.constant 0 : i32
    %c0_i32_1 = arith.constant 0 : i32
    return %c0_i32, %c0_i32_0 : i32, i32
  }
  func.func @transform_4(%arg0: i32) -> (i32, i32) {
    %c0_i32 = arith.constant 0 : i32
    %c0_i32_0 = arith.constant 0 : i32
    %c0_i32_1 = arith.constant 0 : i32
    return %c0_i32, %c0_i32_0 : i32, i32
  }
  func.func @transform_5(%arg0: i32) -> (i32, i32) {
    %c0_i32 = arith.constant 0 : i32
    %c0_i32_0 = arith.constant 0 : i32
    %c0_i32_1 = arith.constant 0 : i32
    return %c0_i32, %c0_i32_0 : i32, i32
  }
  func.func @transform_6(%arg0: i32) -> (i32, i32) {
    %c0_i32 = arith.constant 0 : i32
    %c0_i32_0 = arith.constant 0 : i32
    %c0_i32_1 = arith.constant 0 : i32
    return %c0_i32, %c0_i32_0 : i32, i32
  }
  func.func @transform_7(%arg0: i32) -> (i32, i32) {
    %c0_i32 = arith.constant 0 : i32
    %c0_i32_0 = arith.constant 0 : i32
    %c0_i32_1 = arith.constant 0 : i32
    return %c0_i32, %c0_i32_0 : i32, i32
  }
  func.func @transform_8(%arg0: i32) -> (i32, i32) {
    %c0_i32 = arith.constant 0 : i32
    %c0_i32_0 = arith.constant 0 : i32
    %c0_i32_1 = arith.constant 0 : i32
    return %c0_i32, %c0_i32_0 : i32, i32
  }
  func.func @transform_9(%arg0: i32) -> (i32, i32) {
    %c0_i32 = arith.constant 0 : i32
    %c0_i32_0 = arith.constant 0 : i32
    return %arg0, %c0_i32 : i32, i32
  }
}

</mosaic_0001>

<llo_original>
// kernel: tpu_custom_call.1
$region0: #{tpu_custom_call.1}
  #allocation0 [shape = 'u32[]', space=smem, size = 0x4, offset = 0x4, fixed_abs, tag = 'smem constant byte address 0x4 - core index']
  #allocation1 [shape = 'u32[144,128]{1,0:T(1,128)}', space=vmem, size = 0x12000, scoped, tag = 'internal scratch']
  %s0 = inlined_call_operand.vmem [shape: f32[16,16], index: 0, kind: input, shape index: {}]
  %s1 = inlined_call_operand.vmem [shape: f32[16,1], index: 1, kind: input, shape index: {}]
  %s2 = inlined_call_operand.vmem [shape: f32[16,128], index: 2, kind: input, shape index: {}]
  %s3 = inlined_call_operand.vmem [shape: f32[1,128], index: 3, kind: input, shape index: {}]
  %s4 = inlined_call_operand.vmem [shape: f32[1,128], index: 4, kind: input, shape index: {}]
  %s5 = inlined_call_operand.vmem [shape: f32[128,128], index: 5, kind: input, shape index: {}]
  %s6 = inlined_call_operand.vmem [shape: f32[1,128], index: 6, kind: input, shape index: {}]
  %s7 = inlined_call_operand.vmem [shape: f32[128,16], index: 7, kind: input, shape index: {}]
  %s8 = inlined_call_operand.vmem [shape: f32[1,16], index: 8, kind: input, shape index: {}]
  %s9 = inlined_call_operand.hbm [shape: f32[16,16], index: 9, kind: output, shape index: {}]
  %s10 = sld [smem:[#allocation0]]
  $region69: #{tpu_custom_call.1} parent=0
    _
  %s12 = ssub.s32 1, %s10
  %s13 = scalar_select 0, %s12, %s10
  $region1: #{tpu_custom_call.1} parent=0
    #allocation2 [shape = 'u8[8192]{0}', space=vmem, size = 0x2000, scoped, tag = 'output window, operand 0']
    #allocation3 [shape = 's32[2]{0}', space=sflag, size = 0x8, scoped, tag = 'scoped memory for tpu_custom_call.1']
    %14 = vsyncpa [#allocation3], 0
    %s15 = scalar_lea.sflag [#allocation3], 1
    %16 = vsyncpa %s15, 0
    loop: start=0, step=1, limit=4
    $region2: #{tpu_custom_call.1} parent=1 // loop_pre_header
      _
    $region3: #{tpu_custom_call.1} parent=1 // loop_header
      %s18 = sphi 0, %s22
      %p19 = scmp.ge.s32.totalorder %s18, 4
      %s28 = sphi 0, %s30
      %s31 = sphi 0, %s28
      %s32 = sphi 0, %s31
      %s48 = sphi 0, %s32
      %s54 = sphi 0, %s56
      %s57 = sphi 0, %s54
      %s58 = sphi 0, %s57
      %s74 = sphi 0, %s58
      %s78 = sphi 0, %s78
      %s80 = sphi 0, %s78
      %s81 = sphi 0, %s80
      %s95 = sphi 0, %s81
      %s99 = sphi 0, %s99
      %s101 = sphi 0, %s99
      %s102 = sphi 0, %s101
      %s116 = sphi 0, %s102
      %s120 = sphi 0, %s120
      %s122 = sphi 0, %s120
      %s123 = sphi 0, %s122
      %s137 = sphi 0, %s123
      %s141 = sphi 0, %s141
      %s143 = sphi 0, %s141
      %s144 = sphi 0, %s143
      %s158 = sphi 0, %s144
      %s162 = sphi 0, %s162
      %s164 = sphi 0, %s162
      %s165 = sphi 0, %s164
      %s179 = sphi 0, %s165
      %s183 = sphi 0, %s183
      %s185 = sphi 0, %s183
      %s186 = sphi 0, %s185
      %s200 = sphi 0, %s186
      %s204 = sphi 0, %s204
      %s206 = sphi 0, %s204
      %s207 = sphi 0, %s206
      %s221 = sphi 0, %s207
      %s227 = sphi 0, %s229
      %s230 = sphi 0, %s227
      %s231 = sphi 0, %s230
      %s247 = sphi 0, %s231
    $region4: #{tpu_custom_call.1} parent=1 // loop_header_branch
      %21 = sbr.rel (%p19) target = $region8
    $region5: #{tpu_custom_call.1} parent=1 // loop_body
      %s23 = ssub.s32 %s18, 1
      %s24 = ssub.s32 %s18, 2
      %s25 = sadd.s32 %s18, 1
      %s26 = ssub.s32 %s18, %s25
      %p27 = scmp.eq.s32.totalorder %s26, 0
      %s29 = sadd.s32 %s28, 1
      %s30 = scalar_select %p27, %s28, %s29
      %p33 = pneg %p27
      %p34 = scmp.eq.s32.totalorder %s18, 1
      %p35 = por %p33, %p34
      %p36 = scmp.ne.s32.totalorder %s28, %s31
      %p37 = scmp.eq.s32.totalorder %s18, 0
      %p38 = por %p36, %p37
      %p39 = scmp.ne.s32.totalorder %s28, %s31
      %p40 = scmp.eq.s32.totalorder %s23, 1
      %p41 = por %p39, %p40
      %p42 = scmp.ne.s32.totalorder %s31, %s32
      %p43 = scmp.eq.s32.totalorder %s23, 0
      %p44 = por %p42, %p43
      %p45 = scmp.ne.s32.totalorder %s31, %s32
      %p46 = scmp.eq.s32.totalorder %s24, 1
      %p47 = por %p45, %p46
      %p49 = scmp.ne.s32.totalorder %s32, %s48
      %p50 = scmp.eq.s32.totalorder %s24, 0
      %p51 = por %p49, %p50
      %s52 = ssub.s32 %s18, %s25
      %p53 = scmp.eq.s32.totalorder %s52, 0
      %s55 = sadd.s32 %s54, 1
      %s56 = scalar_select %p53, %s54, %s55
      %p59 = pneg %p53
      %p60 = scmp.eq.s32.totalorder %s18, 1
      %p61 = por %p59, %p60
      %p62 = scmp.ne.s32.totalorder %s54, %s57
      %p63 = scmp.eq.s32.totalorder %s18, 0
      %p64 = por %p62, %p63
      %p65 = scmp.ne.s32.totalorder %s54, %s57
      %p66 = scmp.eq.s32.totalorder %s23, 1
      %p67 = por %p65, %p66
      %p68 = scmp.ne.s32.totalorder %s57, %s58
      %p69 = scmp.eq.s32.totalorder %s23, 0
      %p70 = por %p68, %p69
      %p71 = scmp.ne.s32.totalorder %s57, %s58
      %p72 = scmp.eq.s32.totalorder %s24, 1
      %p73 = por %p71, %p72
      %p75 = scmp.ne.s32.totalorder %s58, %s74
      %p76 = scmp.eq.s32.totalorder %s24, 0
      %p77 = por %p75, %p76
      %s79 = sadd.s32 %s78, 1
      %p82 = scmp.eq.s32.totalorder %s18, 1
      %p83 = scmp.ne.s32.totalorder %s78, %s80
      %p84 = scmp.eq.s32.totalorder %s18, 0
      %p85 = por %p83, %p84
      %p86 = scmp.ne.s32.totalorder %s78, %s80
      %p87 = scmp.eq.s32.totalorder %s23, 1
      %p88 = por %p86, %p87
      %p89 = scmp.ne.s32.totalorder %s80, %s81
      %p90 = scmp.eq.s32.totalorder %s23, 0
      %p91 = por %p89, %p90
      %p92 = scmp.ne.s32.totalorder %s80, %s81
      %p93 = scmp.eq.s32.totalorder %s24, 1
      %p94 = por %p92, %p93
      %p96 = scmp.ne.s32.totalorder %s81, %s95
      %p97 = scmp.eq.s32.totalorder %s24, 0
      %p98 = por %p96, %p97
      %s100 = sadd.s32 %s99, 1
      %p103 = scmp.eq.s32.totalorder %s18, 1
      %p104 = scmp.ne.s32.totalorder %s99, %s101
      %p105 = scmp.eq.s32.totalorder %s18, 0
      %p106 = por %p104, %p105
      %p107 = scmp.ne.s32.totalorder %s99, %s101
      %p108 = scmp.eq.s32.totalorder %s23, 1
      %p109 = por %p107, %p108
      %p110 = scmp.ne.s32.totalorder %s101, %s102
      %p111 = scmp.eq.s32.totalorder %s23, 0
      %p112 = por %p110, %p111
      %p113 = scmp.ne.s32.totalorder %s101, %s102
      %p114 = scmp.eq.s32.totalorder %s24, 1
      %p115 = por %p113, %p114
      %p117 = scmp.ne.s32.totalorder %s102, %s116
      %p118 = scmp.eq.s32.totalorder %s24, 0
      %p119 = por %p117, %p118
      %s121 = sadd.s32 %s120, 1
      %p124 = scmp.eq.s32.totalorder %s18, 1
      %p125 = scmp.ne.s32.totalorder %s120, %s122
      %p126 = scmp.eq.s32.totalorder %s18, 0
      %p127 = por %p125, %p126
      %p128 = scmp.ne.s32.totalorder %s120, %s122
      %p129 = scmp.eq.s32.totalorder %s23, 1
      %p130 = por %p128, %p129
      %p131 = scmp.ne.s32.totalorder %s122, %s123
      %p132 = scmp.eq.s32.totalorder %s23, 0
      %p133 = por %p131, %p132
      %p134 = scmp.ne.s32.totalorder %s122, %s123
      %p135 = scmp.eq.s32.totalorder %s24, 1
      %p136 = por %p134, %p135
      %p138 = scmp.ne.s32.totalorder %s123, %s137
      %p139 = scmp.eq.s32.totalorder %s24, 0
      %p140 = por %p138, %p139
      %s142 = sadd.s32 %s141, 1
      %p145 = scmp.eq.s32.totalorder %s18, 1
      %p146 = scmp.ne.s32.totalorder %s141, %s143
      %p147 = scmp.eq.s32.totalorder %s18, 0
      %p148 = por %p146, %p147
      %p149 = scmp.ne.s32.totalorder %s141, %s143
      %p150 = scmp.eq.s32.totalorder %s23, 1
      %p151 = por %p149, %p150
      %p152 = scmp.ne.s32.totalorder %s143, %s144
      %p153 = scmp.eq.s32.totalorder %s23, 0
      %p154 = por %p152, %p153
      %p155 = scmp.ne.s32.totalorder %s143, %s144
      %p156 = scmp.eq.s32.totalorder %s24, 1
      %p157 = por %p155, %p156
      %p159 = scmp.ne.s32.totalorder %s144, %s158
      %p160 = scmp.eq.s32.totalorder %s24, 0
      %p161 = por %p159, %p160
      %s163 = sadd.s32 %s162, 1
      %p166 = scmp.eq.s32.totalorder %s18, 1
      %p167 = scmp.ne.s32.totalorder %s162, %s164
      %p168 = scmp.eq.s32.totalorder %s18, 0
      %p169 = por %p167, %p168
      %p170 = scmp.ne.s32.totalorder %s162, %s164
      %p171 = scmp.eq.s32.totalorder %s23, 1
      %p172 = por %p170, %p171
      %p173 = scmp.ne.s32.totalorder %s164, %s165
      %p174 = scmp.eq.s32.totalorder %s23, 0
      %p175 = por %p173, %p174
      %p176 = scmp.ne.s32.totalorder %s164, %s165
      %p177 = scmp.eq.s32.totalorder %s24, 1
      %p178 = por %p176, %p177
      %p180 = scmp.ne.s32.totalorder %s165, %s179
      %p181 = scmp.eq.s32.totalorder %s24, 0
      %p182 = por %p180, %p181
      %s184 = sadd.s32 %s183, 1
      %p187 = scmp.eq.s32.totalorder %s18, 1
      %p188 = scmp.ne.s32.totalorder %s183, %s185
      %p189 = scmp.eq.s32.totalorder %s18, 0
      %p190 = por %p188, %p189
      %p191 = scmp.ne.s32.totalorder %s183, %s185
      %p192 = scmp.eq.s32.totalorder %s23, 1
      %p193 = por %p191, %p192
      %p194 = scmp.ne.s32.totalorder %s185, %s186
      %p195 = scmp.eq.s32.totalorder %s23, 0
      %p196 = por %p194, %p195
      %p197 = scmp.ne.s32.totalorder %s185, %s186
      %p198 = scmp.eq.s32.totalorder %s24, 1
      %p199 = por %p197, %p198
      %p201 = scmp.ne.s32.totalorder %s186, %s200
      %p202 = scmp.eq.s32.totalorder %s24, 0
      %p203 = por %p201, %p202
      %s205 = sadd.s32 %s204, 1
      %p208 = scmp.eq.s32.totalorder %s18, 1
      %p209 = scmp.ne.s32.totalorder %s204, %s206
      %p210 = scmp.eq.s32.totalorder %s18, 0
      %p211 = por %p209, %p210
      %p212 = scmp.ne.s32.totalorder %s204, %s206
      %p213 = scmp.eq.s32.totalorder %s23, 1
      %p214 = por %p212, %p213
      %p215 = scmp.ne.s32.totalorder %s206, %s207
      %p216 = scmp.eq.s32.totalorder %s23, 0
      %p217 = por %p215, %p216
      %p218 = scmp.ne.s32.totalorder %s206, %s207
      %p219 = scmp.eq.s32.totalorder %s24, 1
      %p220 = por %p218, %p219
      %p222 = scmp.ne.s32.totalorder %s207, %s221
      %p223 = scmp.eq.s32.totalorder %s24, 0
      %p224 = por %p222, %p223
      %s225 = ssub.s32 %s18, %s25
      %p226 = scmp.eq.s32.totalorder %s225, 0
      %s228 = sadd.s32 %s227, 1
      %s229 = scalar_select %p226, %s227, %s228
      %p232 = pneg %p226
      %p233 = scmp.eq.s32.totalorder %s18, 1
      %p234 = por %p232, %p233
      %p235 = scmp.ne.s32.totalorder %s227, %s230
      %p236 = scmp.eq.s32.totalorder %s18, 0
      %p237 = por %p235, %p236
      %p238 = scmp.ne.s32.totalorder %s227, %s230
      %p239 = scmp.eq.s32.totalorder %s23, 1
      %p240 = por %p238, %p239
      %p241 = scmp.ne.s32.totalorder %s230, %s231
      %p242 = scmp.eq.s32.totalorder %s23, 0
      %p243 = por %p241, %p242
      %p244 = scmp.ne.s32.totalorder %s230, %s231
      %p245 = scmp.eq.s32.totalorder %s24, 1
      %p246 = por %p244, %p245
      %p248 = scmp.ne.s32.totalorder %s231, %s247
      %p249 = scmp.eq.s32.totalorder %s24, 0
      %p250 = por %p248, %p249
      %p251 = scmp.le.s32.totalorder 1, %s18
      %p252 = scmp.lt.s32.totalorder %s18, 3
      %p253 = pnand %p251, %p252
      %p254 = pneg %p253
      // Predicated region
      $region9: #{tpu_custom_call.1} parent=5 // pred_check
        _
      $region10: #{tpu_custom_call.1} parent=5 // pred_check_branch
        %256 = sbr.rel (%p253) target = $region12
      $region11: #{tpu_custom_call.1} parent=5 // pred_region
        %s257 = ssub.s32 %s18, 1
        // Predicated region
        $region13: #{tpu_custom_call.1} parent=11 // pred_check
          %p258 = pneg %p91
        $region14: #{tpu_custom_call.1} parent=11 // pred_check_branch
          %260 = sbr.rel (%p258) target = $region16
        $region15: #{tpu_custom_call.1} parent=11 // pred_region
          _
        $region16: #{tpu_custom_call.1} parent=11 // pred_fallthru
          _
        // Predicated region
        $region17: #{tpu_custom_call.1} parent=11 // pred_check
          %p261 = pneg %p112
        $region18: #{tpu_custom_call.1} parent=11 // pred_check_branch
          %263 = sbr.rel (%p261) target = $region20
        $region19: #{tpu_custom_call.1} parent=11 // pred_region
          _
        $region20: #{tpu_custom_call.1} parent=11 // pred_fallthru
          _
        // Predicated region
        $region21: #{tpu_custom_call.1} parent=11 // pred_check
          %p264 = pneg %p133
        $region22: #{tpu_custom_call.1} parent=11 // pred_check_branch
          %266 = sbr.rel (%p264) target = $region24
        $region23: #{tpu_custom_call.1} parent=11 // pred_region
          _
        $region24: #{tpu_custom_call.1} parent=11 // pred_fallthru
          _
        // Predicated region
        $region25: #{tpu_custom_call.1} parent=11 // pred_check
          %p267 = pneg %p154
        $region26: #{tpu_custom_call.1} parent=11 // pred_check_branch
          %269 = sbr.rel (%p267) target = $region28
        $region27: #{tpu_custom_call.1} parent=11 // pred_region
          _
        $region28: #{tpu_custom_call.1} parent=11 // pred_fallthru
          _
        // Predicated region
        $region29: #{tpu_custom_call.1} parent=11 // pred_check
          %p270 = pneg %p175
        $region30: #{tpu_custom_call.1} parent=11 // pred_check_branch
          %272 = sbr.rel (%p270) target = $region32
        $region31: #{tpu_custom_call.1} parent=11 // pred_region
          _
        $region32: #{tpu_custom_call.1} parent=11 // pred_fallthru
          _
        // Predicated region
        $region33: #{tpu_custom_call.1} parent=11 // pred_check
          %p273 = pneg %p196
        $region34: #{tpu_custom_call.1} parent=11 // pred_check_branch
          %275 = sbr.rel (%p273) target = $region36
        $region35: #{tpu_custom_call.1} parent=11 // pred_region
          _
        $region36: #{tpu_custom_call.1} parent=11 // pred_fallthru
          _
        // Predicated region
        $region37: #{tpu_custom_call.1} parent=11 // pred_check
          %p276 = pneg %p217
        $region38: #{tpu_custom_call.1} parent=11 // pred_check_branch
          %278 = sbr.rel (%p276) target = $region40
        $region39: #{tpu_custom_call.1} parent=11 // pred_region
          _
        $region40: #{tpu_custom_call.1} parent=11 // pred_fallthru
          _
      $region12: #{tpu_custom_call.1} parent=5 // pred_fallthru
        _
      %p279 = scmp.lt.s32.totalorder %s18, 2
      // Predicated region
      $region41: #{tpu_custom_call.1} parent=5 // pred_check
        %p280 = pneg %p279
      $region42: #{tpu_custom_call.1} parent=5 // pred_check_branch
        %282 = sbr.rel (%p280) target = $region44
      $region43: #{tpu_custom_call.1} parent=5 // pred_region
        // Predicated region
        $region45: #{tpu_custom_call.1} parent=43 // pred_check
          %p283 = pneg %p38
        $region46: #{tpu_custom_call.1} parent=43 // pred_check_branch
          %285 = sbr.rel (%p283) target = $region48
        $region47: #{tpu_custom_call.1} parent=43 // pred_region
          %p286 = scmp.lt.s32.totalorder %s18, 1
          %s287 = scalar_select %p286, %s18, 1
          %s288 = smul.addr %s287, 8
          %s289 = scalar_lea.vmem %s0, %s288
        $region48: #{tpu_custom_call.1} parent=43 // pred_fallthru
          _
        // Predicated region
        $region49: #{tpu_custom_call.1} parent=43 // pred_check
          %p290 = pneg %p64
        $region50: #{tpu_custom_call.1} parent=43 // pred_check_branch
          %292 = sbr.rel (%p290) target = $region52
        $region51: #{tpu_custom_call.1} parent=43 // pred_region
          %p293 = scmp.lt.s32.totalorder %s18, 1
          %s294 = scalar_select %p293, %s18, 1
          %s295 = smul.addr %s294, 8
          %s296 = scalar_lea.vmem %s1, %s295
        $region52: #{tpu_custom_call.1} parent=43 // pred_fallthru
          _
      $region44: #{tpu_custom_call.1} parent=5 // pred_fallthru
        _
      %p297 = scmp.le.s32.totalorder 1, %s18
      %p298 = scmp.lt.s32.totalorder %s18, 3
      %p299 = pnand %p297, %p298
      %p300 = pneg %p299
      // Predicated region
      $region53: #{tpu_custom_call.1} parent=5 // pred_check
        _
      $region54: #{tpu_custom_call.1} parent=5 // pred_check_branch
        %302 = sbr.rel (%p299) target = $region56
      $region55: #{tpu_custom_call.1} parent=5 // pred_region
        %s303 = ssub.s32 %s18, 1
        %p304 = scmp.lt.s32.totalorder %s23, 1
        %s305 = scalar_select %p304, %s23, 1
        %s306 = smul.addr %s305, 8
        %s307 = scalar_lea.vmem %s0, %s306
        %p308 = pneg %p44
        %p309 = pneg %p41
        %p310 = scmp.lt.s32.totalorder %s23, 1
        %s311 = scalar_select %p310, %s23, 1
        %s312 = smul.addr %s311, 8
        %s313 = scalar_lea.vmem %s1, %s312
        %p314 = pneg %p70
        %p315 = pneg %p67
        %p316 = pneg %p91
        %p317 = pneg %p88
        %p318 = pneg %p112
        %p319 = pneg %p109
        %p320 = pneg %p133
        %p321 = pneg %p130
        %p322 = pneg %p154
        %p323 = pneg %p151
        %p324 = pneg %p175
        %p325 = pneg %p172
        %p326 = pneg %p196
        %p327 = pneg %p193
        %p328 = pneg %p217
        %p329 = pneg %p214
        %p330 = pneg %p243
        %p331 = pneg %p240
        %s332 = sand.u32 %s230, 1
        %s333 = scalar_lea.sflag [#allocation3], %s332
        %s334 = sand.u32 %s230, 1
        %s335 = smul.addr %s334, 8
        %s336 = scalar_lea.vmem [#allocation2], %s335
        %p337 = scmp.lt.s32.totalorder %s23, 1
        %s338 = scalar_select %p337, %s23, 1
        %s339 = smul.addr %s338, 8
        %s340 = scalar_lea.vmem %s0, %s339
        %p341 = scmp.lt.s32.totalorder %s23, 1
        %s342 = scalar_select %p341, %s23, 1
        %s343 = smul.addr %s342, 8
        %s344 = scalar_lea.vmem %s1, %s343
        %v345 = vld [vmem:[%s340] sm:$0xff]
        %v346 = vld [vmem:[%s344] sm:$0xff]
        %v347 = vld [vmem:[%s2] sm:$0xff]
        %v348 = vld [vmem:[%s2 + $0x8] sm:$0xff]
        %v349 = vld [vmem:[%s3] sm:$0x1]
        %351 = vset.pattern.permute.xlu0 0
        %352 = vperm.xlu0 %351, %v346
        %v353 = vpop.permute.xlu0 %352
        %v356 = vlaneseq
        %v357 = vshrl.u32 %v356, 7
        %v358 = vsub.s32 0, %v357
        %v359 = vrot.slane %v349, %v358
        %v361 = vmul.f32 %v353, %v359
        %vm362 = vcmask 130048
        %v364 = vsel %vm362, %v345, 0
        %366 = vmatprep.subr.mxu0 0.0
        %v367 = vand.u32 %v347, 4294901760
        %368 = vmatpush1.msra.mxu0 %v367
        %369 = vmatprep.subr.mxu0 0.0
        %v370 = vand.u32 %v348, 4294901760
        %371 = vmatpush1.msra.mxu0 %v370
        %372 = vmatprep.subr.mxu0 0.0
        %373 = vmatpush1.msra.mxu0 0.0
        %374 = vmatprep.subr.mxu0 0.0
        %375 = vmatpush1.msra.mxu0 0.0
        %376 = vmatprep.subr.mxu0 0.0
        %377 = vmatpush1.msra.mxu0 0.0
        %378 = vmatprep.subr.mxu0 0.0
        %379 = vmatpush1.msra.mxu0 0.0
        %380 = vmatprep.subr.mxu0 0.0
        %381 = vmatpush1.msra.mxu0 0.0
        %382 = vmatprep.subr.mxu0 0.0
        %383 = vmatpush1.msra.mxu0 0.0
        %384 = vmatprep.subr.mxu0 0.0
        %385 = vmatpush1.msra.mxu0 0.0
        %386 = vmatprep.subr.mxu0 0.0
        %387 = vmatpush1.msra.mxu0 0.0
        %388 = vmatprep.subr.mxu0 0.0
        %389 = vmatpush1.msra.mxu0 0.0
        %390 = vmatprep.subr.mxu0 0.0
        %391 = vmatpush1.msra.mxu0 0.0
        %392 = vmatprep.subr.mxu0 0.0
        %393 = vmatpush1.msra.mxu0 0.0
        %394 = vmatprep.subr.mxu0 0.0
        %395 = vmatpush1.msra.mxu0 0.0
        %396 = vmatprep.subr.mxu0 0.0
        %397 = vmatpush1.msra.mxu0 0.0
        %398 = vmatprep.subr.mxu0 0.0
        %399 = vmatpush1.msra.mxu0 0.0
        %400 = vmatprep.subr.mxu0 0.0
        %401 = vmatpush1.msra.mxu0 0.0
        %402 = vmatprep.subr.mxu0 0.0
        %403 = vmatpush1.msra.mxu0 0.0
        %404 = vmatprep.subr.mxu0 0.0
        %405 = vmatpush1.msra.mxu0 0.0
        %406 = vmatprep.subr.mxu0 0.0
        %407 = vmatpush1.msra.mxu0 0.0
        %408 = vmatprep.subr.mxu0 0.0
        %409 = vmatpush1.msra.mxu0 0.0
        %410 = vmatprep.subr.mxu0 0.0
        %411 = vmatpush1.msra.mxu0 0.0
        %412 = vmatprep.subr.mxu0 0.0
        %413 = vmatpush1.msra.mxu0 0.0
        %414 = vmatprep.subr.mxu0 0.0
        %415 = vmatpush1.msra.mxu0 0.0
        %416 = vmatprep.subr.mxu0 0.0
        %417 = vmatpush1.msra.mxu0 0.0
        %418 = vmatprep.subr.mxu0 0.0
        %419 = vmatpush1.msra.mxu0 0.0
        %420 = vmatprep.subr.mxu0 0.0
        %421 = vmatpush1.msra.mxu0 0.0
        %422 = vmatprep.subr.mxu0 0.0
        %423 = vmatpush1.msra.mxu0 0.0
        %424 = vmatprep.subr.mxu0 0.0
        %425 = vmatpush1.msra.mxu0 0.0
        %426 = vmatprep.subr.mxu0 0.0
        %427 = vmatpush1.msra.mxu0 0.0
        %428 = vmatprep.subr.mxu0 0.0
        %429 = vmatpush1.msra.mxu0 0.0
        %430 = vmatprep.subr.mxu0 0.0
        %431 = vmatpush1.msra.mxu0 0.0
        %432 = vmatprep.mubr.f32.mxu0 0.0
        %v433 = vand.u32 %v364, 4294901760
        %v434 = vsub.f32 %v364, %v433
        %v435 = vand.u32 %v434, 4294901760
        %v436 = vsub.f32 %v434, %v435
        %v437 = vand.u32 %v436, 4294901760
        %438 = vmatmul.mubr.f32.gmra.mrb[0].mxu0 %v437
        %v439 = vpop.f32.mrb[0].mxu0
        %v440 = vadd.f32 %v361, %v439
        %v441 = vpop.f32.mrb[0].mxu0
        %442 = vdwg.mxu0
        %443 = vmatprep.subr.mxu0 0.0
        %v444 = vand.u32 %v347, 4294901760
        %v445 = vsub.f32 %v347, %v444
        %v446 = vand.u32 %v445, 4294901760
        %v447 = vsub.f32 %v445, %v446
        %v448 = vand.u32 %v447, 4294901760
        %449 = vmatpush1.msra.mxu0 %v448
        %450 = vmatprep.subr.mxu0 0.0
        %v451 = vand.u32 %v348, 4294901760
        %v452 = vsub.f32 %v348, %v451
        %v453 = vand.u32 %v452, 4294901760
        %v454 = vsub.f32 %v452, %v453
        %v455 = vand.u32 %v454, 4294901760
        %456 = vmatpush1.msra.mxu0 %v455
        %457 = vmatprep.subr.mxu0 0.0
        %458 = vmatpush1.msra.mxu0 0.0
        %459 = vmatprep.subr.mxu0 0.0
        %460 = vmatpush1.msra.mxu0 0.0
        %461 = vmatprep.subr.mxu0 0.0
        %462 = vmatpush1.msra.mxu0 0.0
        %463 = vmatprep.subr.mxu0 0.0
        %464 = vmatpush1.msra.mxu0 0.0
        %465 = vmatprep.subr.mxu0 0.0
        %466 = vmatpush1.msra.mxu0 0.0
        %467 = vmatprep.subr.mxu0 0.0
        %468 = vmatpush1.msra.mxu0 0.0
        %469 = vmatprep.subr.mxu0 0.0
        %470 = vmatpush1.msra.mxu0 0.0
        %471 = vmatprep.subr.mxu0 0.0
        %472 = vmatpush1.msra.mxu0 0.0
        %473 = vmatprep.subr.mxu0 0.0
        %474 = vmatpush1.msra.mxu0 0.0
        %475 = vmatprep.subr.mxu0 0.0
        %476 = vmatpush1.msra.mxu0 0.0
        %477 = vmatprep.subr.mxu0 0.0
        %478 = vmatpush1.msra.mxu0 0.0
        %479 = vmatprep.subr.mxu0 0.0
        %480 = vmatpush1.msra.mxu0 0.0
        %481 = vmatprep.subr.mxu0 0.0
        %482 = vmatpush1.msra.mxu0 0.0
        %483 = vmatprep.subr.mxu0 0.0
        %484 = vmatpush1.msra.mxu0 0.0
        %485 = vmatprep.subr.mxu0 0.0
        %486 = vmatpush1.msra.mxu0 0.0
        %487 = vmatprep.subr.mxu0 0.0
        %488 = vmatpush1.msra.mxu0 0.0
        %489 = vmatprep.subr.mxu0 0.0
        %490 = vmatpush1.msra.mxu0 0.0
        %491 = vmatprep.subr.mxu0 0.0
        %492 = vmatpush1.msra.mxu0 0.0
        %493 = vmatprep.subr.mxu0 0.0
        %494 = vmatpush1.msra.mxu0 0.0
        %495 = vmatprep.subr.mxu0 0.0
        %496 = vmatpush1.msra.mxu0 0.0
        %497 = vmatprep.subr.mxu0 0.0
        %498 = vmatpush1.msra.mxu0 0.0
        %499 = vmatprep.subr.mxu0 0.0
        %500 = vmatpush1.msra.mxu0 0.0
        %501 = vmatprep.subr.mxu0 0.0
        %502 = vmatpush1.msra.mxu0 0.0
        %503 = vmatprep.subr.mxu0 0.0
        %504 = vmatpush1.msra.mxu0 0.0
        %505 = vmatprep.subr.mxu0 0.0
        %506 = vmatpush1.msra.mxu0 0.0
        %507 = vmatprep.subr.mxu0 0.0
        %508 = vmatpush1.msra.mxu0 0.0
        %509 = vmatprep.subr.mxu0 0.0
        %510 = vmatpush1.msra.mxu0 0.0
        %511 = vmatprep.subr.mxu0 0.0
        %512 = vmatpush1.msra.mxu0 0.0
        %513 = vmatprep.subr.mxu0 0.0
        %514 = vmatpush1.msra.mxu0 0.0
        %515 = vmatprep.subr.mxu0 0.0
        %516 = vmatpush1.msra.mxu0 0.0
        %517 = vmatprep.mubr.f32.mxu0 0.0
        %v518 = vand.u32 %v364, 4294901760
        %519 = vmatmul.mubr.f32.gmra.mrb[0].mxu0 %v518
        %v520 = vpop.f32.mrb[0].mxu0
        %v521 = vadd.f32 %v440, %v520
        %v522 = vpop.f32.mrb[0].mxu0
        %523 = vdwg.mxu0
        %524 = vmatprep.subr.mxu0 0.0
        %v525 = vand.u32 %v347, 4294901760
        %v526 = vsub.f32 %v347, %v525
        %527 = vmatpush1.msra.mxu0 %v526
        %528 = vmatprep.subr.mxu0 0.0
        %v529 = vand.u32 %v348, 4294901760
        %v530 = vsub.f32 %v348, %v529
        %531 = vmatpush1.msra.mxu0 %v530
        %532 = vmatprep.subr.mxu0 0.0
        %533 = vmatpush1.msra.mxu0 0.0
        %534 = vmatprep.subr.mxu0 0.0
        %535 = vmatpush1.msra.mxu0 0.0
        %536 = vmatprep.subr.mxu0 0.0
        %537 = vmatpush1.msra.mxu0 0.0
        %538 = vmatprep.subr.mxu0 0.0
        %539 = vmatpush1.msra.mxu0 0.0
        %540 = vmatprep.subr.mxu0 0.0
        %541 = vmatpush1.msra.mxu0 0.0
        %542 = vmatprep.subr.mxu0 0.0
        %543 = vmatpush1.msra.mxu0 0.0
        %544 = vmatprep.subr.mxu0 0.0
        %545 = vmatpush1.msra.mxu0 0.0
        %546 = vmatprep.subr.mxu0 0.0
        %547 = vmatpush1.msra.mxu0 0.0
        %548 = vmatprep.subr.mxu0 0.0
        %549 = vmatpush1.msra.mxu0 0.0
        %550 = vmatprep.subr.mxu0 0.0
        %551 = vmatpush1.msra.mxu0 0.0
        %552 = vmatprep.subr.mxu0 0.0
        %553 = vmatpush1.msra.mxu0 0.0
        %554 = vmatprep.subr.mxu0 0.0
        %555 = vmatpush1.msra.mxu0 0.0
        %556 = vmatprep.subr.mxu0 0.0
        %557 = vmatpush1.msra.mxu0 0.0
        %558 = vmatprep.subr.mxu0 0.0
        %559 = vmatpush1.msra.mxu0 0.0
        %560 = vmatprep.subr.mxu0 0.0
        %561 = vmatpush1.msra.mxu0 0.0
        %562 = vmatprep.subr.mxu0 0.0
        %563 = vmatpush1.msra.mxu0 0.0
        %564 = vmatprep.subr.mxu0 0.0
        %565 = vmatpush1.msra.mxu0 0.0
        %566 = vmatprep.subr.mxu0 0.0
        %567 = vmatpush1.msra.mxu0 0.0
        %568 = vmatprep.subr.mxu0 0.0
        %569 = vmatpush1.msra.mxu0 0.0
        %570 = vmatprep.subr.mxu0 0.0
        %571 = vmatpush1.msra.mxu0 0.0
        %572 = vmatprep.subr.mxu0 0.0
        %573 = vmatpush1.msra.mxu0 0.0
        %574 = vmatprep.subr.mxu0 0.0
        %575 = vmatpush1.msra.mxu0 0.0
        %576 = vmatprep.subr.mxu0 0.0
        %577 = vmatpush1.msra.mxu0 0.0
        %578 = vmatprep.subr.mxu0 0.0
        %579 = vmatpush1.msra.mxu0 0.0
        %580 = vmatprep.subr.mxu0 0.0
        %581 = vmatpush1.msra.mxu0 0.0
        %582 = vmatprep.subr.mxu0 0.0
        %583 = vmatpush1.msra.mxu0 0.0
        %584 = vmatprep.subr.mxu0 0.0
        %585 = vmatpush1.msra.mxu0 0.0
        %586 = vmatprep.subr.mxu0 0.0
        %587 = vmatpush1.msra.mxu0 0.0
        %588 = vmatprep.subr.mxu0 0.0
        %589 = vmatpush1.msra.mxu0 0.0
        %590 = vmatprep.subr.mxu0 0.0
        %591 = vmatpush1.msra.mxu0 0.0
        %592 = vmatprep.mubr.f32.mxu0 0.0
        %v593 = vand.u32 %v364, 4294901760
        %v594 = vsub.f32 %v364, %v593
        %595 = vmatmul.mubr.f32.gmra.mrb[0].mxu0 %v594
        %v596 = vpop.f32.mrb[0].mxu0
        %v597 = vadd.f32 %v521, %v596
        %v598 = vpop.f32.mrb[0].mxu0
        %599 = vdwg.mxu0
        %600 = vmatprep.subr.mxu0 0.0
        %v601 = vand.u32 %v347, 4294901760
        %602 = vmatpush1.msra.mxu0 %v601
        %603 = vmatprep.subr.mxu0 0.0
        %v604 = vand.u32 %v348, 4294901760
        %605 = vmatpush1.msra.mxu0 %v604
        %606 = vmatprep.subr.mxu0 0.0
        %607 = vmatpush1.msra.mxu0 0.0
        %608 = vmatprep.subr.mxu0 0.0
        %609 = vmatpush1.msra.mxu0 0.0
        %610 = vmatprep.subr.mxu0 0.0
        %611 = vmatpush1.msra.mxu0 0.0
        %612 = vmatprep.subr.mxu0 0.0
        %613 = vmatpush1.msra.mxu0 0.0
        %614 = vmatprep.subr.mxu0 0.0
        %615 = vmatpush1.msra.mxu0 0.0
        %616 = vmatprep.subr.mxu0 0.0
        %617 = vmatpush1.msra.mxu0 0.0
        %618 = vmatprep.subr.mxu0 0.0
        %619 = vmatpush1.msra.mxu0 0.0
        %620 = vmatprep.subr.mxu0 0.0
        %621 = vmatpush1.msra.mxu0 0.0
        %622 = vmatprep.subr.mxu0 0.0
        %623 = vmatpush1.msra.mxu0 0.0
        %624 = vmatprep.subr.mxu0 0.0
        %625 = vmatpush1.msra.mxu0 0.0
        %626 = vmatprep.subr.mxu0 0.0
        %627 = vmatpush1.msra.mxu0 0.0
        %628 = vmatprep.subr.mxu0 0.0
        %629 = vmatpush1.msra.mxu0 0.0
        %630 = vmatprep.subr.mxu0 0.0
        %631 = vmatpush1.msra.mxu0 0.0
        %632 = vmatprep.subr.mxu0 0.0
        %633 = vmatpush1.msra.mxu0 0.0
        %634 = vmatprep.subr.mxu0 0.0
        %635 = vmatpush1.msra.mxu0 0.0
        %636 = vmatprep.subr.mxu0 0.0
        %637 = vmatpush1.msra.mxu0 0.0
        %638 = vmatprep.subr.mxu0 0.0
        %639 = vmatpush1.msra.mxu0 0.0
        %640 = vmatprep.subr.mxu0 0.0
        %641 = vmatpush1.msra.mxu0 0.0
        %642 = vmatprep.subr.mxu0 0.0
        %643 = vmatpush1.msra.mxu0 0.0
        %644 = vmatprep.subr.mxu0 0.0
        %645 = vmatpush1.msra.mxu0 0.0
        %646 = vmatprep.subr.mxu0 0.0
        %647 = vmatpush1.msra.mxu0 0.0
        %648 = vmatprep.subr.mxu0 0.0
        %649 = vmatpush1.msra.mxu0 0.0
        %650 = vmatprep.subr.mxu0 0.0
        %651 = vmatpush1.msra.mxu0 0.0
        %652 = vmatprep.subr.mxu0 0.0
        %653 = vmatpush1.msra.mxu0 0.0
        %654 = vmatprep.subr.mxu0 0.0
        %655 = vmatpush1.msra.mxu0 0.0
        %656 = vmatprep.subr.mxu0 0.0
        %657 = vmatpush1.msra.mxu0 0.0
        %658 = vmatprep.subr.mxu0 0.0
        %659 = vmatpush1.msra.mxu0 0.0
        %660 = vmatprep.subr.mxu0 0.0
        %661 = vmatpush1.msra.mxu0 0.0
        %662 = vmatprep.subr.mxu0 0.0
        %663 = vmatpush1.msra.mxu0 0.0
        %664 = vmatprep.subr.mxu0 0.0
        %665 = vmatpush1.msra.mxu0 0.0
        %666 = vmatprep.mubr.f32.mxu0 0.0
        %v667 = vand.u32 %v364, 4294901760
        %v668 = vsub.f32 %v364, %v667
        %v669 = vand.u32 %v668, 4294901760
        %670 = vmatmul.mubr.f32.gmra.mrb[0].mxu0 %v669
        %v671 = vpop.f32.mrb[0].mxu0
        %v672 = vadd.f32 %v597, %v671
        %v673 = vpop.f32.mrb[0].mxu0
        %674 = vdwg.mxu0
        %675 = vmatprep.subr.mxu0 0.0
        %v676 = vand.u32 %v347, 4294901760
        %v677 = vsub.f32 %v347, %v676
        %v678 = vand.u32 %v677, 4294901760
        %679 = vmatpush1.msra.mxu0 %v678
        %680 = vmatprep.subr.mxu0 0.0
        %v681 = vand.u32 %v348, 4294901760
        %v682 = vsub.f32 %v348, %v681
        %v683 = vand.u32 %v682, 4294901760
        %684 = vmatpush1.msra.mxu0 %v683
        %685 = vmatprep.subr.mxu0 0.0
        %686 = vmatpush1.msra.mxu0 0.0
        %687 = vmatprep.subr.mxu0 0.0
        %688 = vmatpush1.msra.mxu0 0.0
        %689 = vmatprep.subr.mxu0 0.0
        %690 = vmatpush1.msra.mxu0 0.0
        %691 = vmatprep.subr.mxu0 0.0
        %692 = vmatpush1.msra.mxu0 0.0
        %693 = vmatprep.subr.mxu0 0.0
        %694 = vmatpush1.msra.mxu0 0.0
        %695 = vmatprep.subr.mxu0 0.0
        %696 = vmatpush1.msra.mxu0 0.0
        %697 = vmatprep.subr.mxu0 0.0
        %698 = vmatpush1.msra.mxu0 0.0
        %699 = vmatprep.subr.mxu0 0.0
        %700 = vmatpush1.msra.mxu0 0.0
        %701 = vmatprep.subr.mxu0 0.0
        %702 = vmatpush1.msra.mxu0 0.0
        %703 = vmatprep.subr.mxu0 0.0
        %704 = vmatpush1.msra.mxu0 0.0
        %705 = vmatprep.subr.mxu0 0.0
        %706 = vmatpush1.msra.mxu0 0.0
        %707 = vmatprep.subr.mxu0 0.0
        %708 = vmatpush1.msra.mxu0 0.0
        %709 = vmatprep.subr.mxu0 0.0
        %710 = vmatpush1.msra.mxu0 0.0
        %711 = vmatprep.subr.mxu0 0.0
        %712 = vmatpush1.msra.mxu0 0.0
        %713 = vmatprep.subr.mxu0 0.0
        %714 = vmatpush1.msra.mxu0 0.0
        %715 = vmatprep.subr.mxu0 0.0
        %716 = vmatpush1.msra.mxu0 0.0
        %717 = vmatprep.subr.mxu0 0.0
        %718 = vmatpush1.msra.mxu0 0.0
        %719 = vmatprep.subr.mxu0 0.0
        %720 = vmatpush1.msra.mxu0 0.0
        %721 = vmatprep.subr.mxu0 0.0
        %722 = vmatpush1.msra.mxu0 0.0
        %723 = vmatprep.subr.mxu0 0.0
        %724 = vmatpush1.msra.mxu0 0.0
        %725 = vmatprep.subr.mxu0 0.0
        %726 = vmatpush1.msra.mxu0 0.0
        %727 = vmatprep.subr.mxu0 0.0
        %728 = vmatpush1.msra.mxu0 0.0
        %729 = vmatprep.subr.mxu0 0.0
        %730 = vmatpush1.msra.mxu0 0.0
        %731 = vmatprep.subr.mxu0 0.0
        %732 = vmatpush1.msra.mxu0 0.0
        %733 = vmatprep.subr.mxu0 0.0
        %734 = vmatpush1.msra.mxu0 0.0
        %735 = vmatprep.subr.mxu0 0.0
        %736 = vmatpush1.msra.mxu0 0.0
        %737 = vmatprep.subr.mxu0 0.0
        %738 = vmatpush1.msra.mxu0 0.0
        %739 = vmatprep.subr.mxu0 0.0
        %740 = vmatpush1.msra.mxu0 0.0
        %741 = vmatprep.subr.mxu0 0.0
        %742 = vmatpush1.msra.mxu0 0.0
        %743 = vmatprep.subr.mxu0 0.0
        %744 = vmatpush1.msra.mxu0 0.0
        %745 = vmatprep.mubr.f32.mxu0 0.0
        %v746 = vand.u32 %v364, 4294901760
        %747 = vmatmul.mubr.f32.gmra.mrb[0].mxu0 %v746
        %v748 = vpop.f32.mrb[0].mxu0
        %v749 = vadd.f32 %v672, %v748
        %v750 = vpop.f32.mrb[0].mxu0
        %751 = vdwg.mxu0
        %752 = vmatprep.subr.mxu0 0.0
        %v753 = vand.u32 %v347, 4294901760
        %754 = vmatpush1.msra.mxu0 %v753
        %755 = vmatprep.subr.mxu0 0.0
        %v756 = vand.u32 %v348, 4294901760
        %757 = vmatpush1.msra.mxu0 %v756
        %758 = vmatprep.subr.mxu0 0.0
        %759 = vmatpush1.msra.mxu0 0.0
        %760 = vmatprep.subr.mxu0 0.0
        %761 = vmatpush1.msra.mxu0 0.0
        %762 = vmatprep.subr.mxu0 0.0
        %763 = vmatpush1.msra.mxu0 0.0
        %764 = vmatprep.subr.mxu0 0.0
        %765 = vmatpush1.msra.mxu0 0.0
        %766 = vmatprep.subr.mxu0 0.0
        %767 = vmatpush1.msra.mxu0 0.0
        %768 = vmatprep.subr.mxu0 0.0
        %769 = vmatpush1.msra.mxu0 0.0
        %770 = vmatprep.subr.mxu0 0.0
        %771 = vmatpush1.msra.mxu0 0.0
        %772 = vmatprep.subr.mxu0 0.0
        %773 = vmatpush1.msra.mxu0 0.0
        %774 = vmatprep.subr.mxu0 0.0
        %775 = vmatpush1.msra.mxu0 0.0
        %776 = vmatprep.subr.mxu0 0.0
        %777 = vmatpush1.msra.mxu0 0.0
        %778 = vmatprep.subr.mxu0 0.0
        %779 = vmatpush1.msra.mxu0 0.0
        %780 = vmatprep.subr.mxu0 0.0
        %781 = vmatpush1.msra.mxu0 0.0
        %782 = vmatprep.subr.mxu0 0.0
        %783 = vmatpush1.msra.mxu0 0.0
        %784 = vmatprep.subr.mxu0 0.0
        %785 = vmatpush1.msra.mxu0 0.0
        %786 = vmatprep.subr.mxu0 0.0
        %787 = vmatpush1.msra.mxu0 0.0
        %788 = vmatprep.subr.mxu0 0.0
        %789 = vmatpush1.msra.mxu0 0.0
        %790 = vmatprep.subr.mxu0 0.0
        %791 = vmatpush1.msra.mxu0 0.0
        %792 = vmatprep.subr.mxu0 0.0
        %793 = vmatpush1.msra.mxu0 0.0
        %794 = vmatprep.subr.mxu0 0.0
        %795 = vmatpush1.msra.mxu0 0.0
        %796 = vmatprep.subr.mxu0 0.0
        %797 = vmatpush1.msra.mxu0 0.0
        %798 = vmatprep.subr.mxu0 0.0
        %799 = vmatpush1.msra.mxu0 0.0
        %800 = vmatprep.subr.mxu0 0.0
        %801 = vmatpush1.msra.mxu0 0.0
        %802 = vmatprep.subr.mxu0 0.0
        %803 = vmatpush1.msra.mxu0 0.0
        %804 = vmatprep.subr.mxu0 0.0
        %805 = vmatpush1.msra.mxu0 0.0
        %806 = vmatprep.subr.mxu0 0.0
        %807 = vmatpush1.msra.mxu0 0.0
        %808 = vmatprep.subr.mxu0 0.0
        %809 = vmatpush1.msra.mxu0 0.0
        %810 = vmatprep.subr.mxu0 0.0
        %811 = vmatpush1.msra.mxu0 0.0
        %812 = vmatprep.subr.mxu0 0.0
        %813 = vmatpush1.msra.mxu0 0.0
        %814 = vmatprep.subr.mxu0 0.0
        %815 = vmatpush1.msra.mxu0 0.0
        %816 = vmatprep.subr.mxu0 0.0
        %817 = vmatpush1.msra.mxu0 0.0
        %818 = vmatprep.mubr.f32.mxu0 0.0
        %v819 = vand.u32 %v364, 4294901760
        %820 = vmatmul.mubr.f32.gmra.mrb[0].mxu0 %v819
        %v821 = vpop.f32.mrb[0].mxu0
        %v822 = vadd.f32 %v749, %v821
        %v823 = vpop.f32.mrb[0].mxu0
        %824 = vdwg.mxu0
        %v825 = vld [vmem:[%s4] sm:$0x1]
        %v827 = vlaneseq
        %v828 = vshrl.u32 %v827, 7
        %v829 = vsub.s32 0, %v828
        %v830 = vrot.slane %v825, %v829
        %v832 = vadd.f32 %v822, %v830
        %v833 = vxor.u32 %v832, 2147483648
        %v834 = vmul.f32 %v833, 1.442695
        %v835 = vpow.pop %v834
        %v836 = vadd.f32 %v835, 1.0
        %v837 = vrcp.pop %v836
        %v838 = vmul.f32 1.0, %v837
        %v839 = vmul.f32 %v832, %v838
        %v840 = vld [vmem:[%s5] sm:$0xff]
        %v841 = vld [vmem:[%s5 + $0x8] sm:$0xff]
        %v842 = vld [vmem:[%s5 + $0x10] sm:$0xff]
        %v843 = vld [vmem:[%s5 + $0x18] sm:$0xff]
        %v844 = vld [vmem:[%s5 + $0x20] sm:$0xff]
        %v845 = vld [vmem:[%s5 + $0x28] sm:$0xff]
        %v846 = vld [vmem:[%s5 + $0x30] sm:$0xff]
        %v847 = vld [vmem:[%s5 + $0x38] sm:$0xff]
        %v848 = vld [vmem:[%s5 + $0x40] sm:$0xff]
        %v849 = vld [vmem:[%s5 + $0x48] sm:$0xff]
        %v850 = vld [vmem:[%s5 + $0x50] sm:$0xff]
        %v851 = vld [vmem:[%s5 + $0x58] sm:$0xff]
        %v852 = vld [vmem:[%s5 + $0x60] sm:$0xff]
        %v853 = vld [vmem:[%s5 + $0x68] sm:$0xff]
        %v854 = vld [vmem:[%s5 + $0x70] sm:$0xff]
        %v855 = vld [vmem:[%s5 + $0x78] sm:$0xff]
        %v856 = vld [vmem:[%s6] sm:$0x1]
        %v858 = vlaneseq
        %v859 = vshrl.u32 %v858, 7
        %v860 = vsub.s32 0, %v859
        %v861 = vrot.slane %v856, %v860
        %863 = vmatprep.subr.mxu0 0.0
        %v864 = vand.u32 %v840, 4294901760
        %865 = vmatpush1.msra.mxu0 %v864
        %866 = vmatprep.subr.mxu0 0.0
        %v867 = vand.u32 %v841, 4294901760
        %868 = vmatpush1.msra.mxu0 %v867
        %869 = vmatprep.subr.mxu0 0.0
        %v870 = vand.u32 %v842, 4294901760
        %871 = vmatpush1.msra.mxu0 %v870
        %872 = vmatprep.subr.mxu0 0.0
        %v873 = vand.u32 %v843, 4294901760
        %874 = vmatpush1.msra.mxu0 %v873
        %875 = vmatprep.subr.mxu0 0.0
        %v876 = vand.u32 %v844, 4294901760
        %877 = vmatpush1.msra.mxu0 %v876
        %878 = vmatprep.subr.mxu0 0.0
        %v879 = vand.u32 %v845, 4294901760
        %880 = vmatpush1.msra.mxu0 %v879
        %881 = vmatprep.subr.mxu0 0.0
        %v882 = vand.u32 %v846, 4294901760
        %883 = vmatpush1.msra.mxu0 %v882
        %884 = vmatprep.subr.mxu0 0.0
        %v885 = vand.u32 %v847, 4294901760
        %886 = vmatpush1.msra.mxu0 %v885
        %887 = vmatprep.subr.mxu0 0.0
        %v888 = vand.u32 %v848, 4294901760
        %889 = vmatpush1.msra.mxu0 %v888
        %890 = vmatprep.subr.mxu0 0.0
        %v891 = vand.u32 %v849, 4294901760
        %892 = vmatpush1.msra.mxu0 %v891
        %893 = vmatprep.subr.mxu0 0.0
        %v894 = vand.u32 %v850, 4294901760
        %895 = vmatpush1.msra.mxu0 %v894
        %896 = vmatprep.subr.mxu0 0.0
        %v897 = vand.u32 %v851, 4294901760
        %898 = vmatpush1.msra.mxu0 %v897
        %899 = vmatprep.subr.mxu0 0.0
        %v900 = vand.u32 %v852, 4294901760
        %901 = vmatpush1.msra.mxu0 %v900
        %902 = vmatprep.subr.mxu0 0.0
        %v903 = vand.u32 %v853, 4294901760
        %904 = vmatpush1.msra.mxu0 %v903
        %905 = vmatprep.subr.mxu0 0.0
        %v906 = vand.u32 %v854, 4294901760
        %907 = vmatpush1.msra.mxu0 %v906
        %908 = vmatprep.subr.mxu0 0.0
        %v909 = vand.u32 %v855, 4294901760
        %910 = vmatpush1.msra.mxu0 %v909
        %911 = vmatprep.subr.mxu0 0.0
        %912 = vmatpush1.msra.mxu0 0.0
        %913 = vmatprep.subr.mxu0 0.0
        %914 = vmatpush1.msra.mxu0 0.0
        %915 = vmatprep.subr.mxu0 0.0
        %916 = vmatpush1.msra.mxu0 0.0
        %917 = vmatprep.subr.mxu0 0.0
        %918 = vmatpush1.msra.mxu0 0.0
        %919 = vmatprep.subr.mxu0 0.0
        %920 = vmatpush1.msra.mxu0 0.0
        %921 = vmatprep.subr.mxu0 0.0
        %922 = vmatpush1.msra.mxu0 0.0
        %923 = vmatprep.subr.mxu0 0.0
        %924 = vmatpush1.msra.mxu0 0.0
        %925 = vmatprep.subr.mxu0 0.0
        %926 = vmatpush1.msra.mxu0 0.0
        %927 = vmatprep.subr.mxu0 0.0
        %928 = vmatpush1.msra.mxu0 0.0
        %929 = vmatprep.subr.mxu0 0.0
        %930 = vmatpush1.msra.mxu0 0.0
        %931 = vmatprep.subr.mxu0 0.0
        %932 = vmatpush1.msra.mxu0 0.0
        %933 = vmatprep.subr.mxu0 0.0
        %934 = vmatpush1.msra.mxu0 0.0
        %935 = vmatprep.subr.mxu0 0.0
        %936 = vmatpush1.msra.mxu0 0.0
        %937 = vmatprep.subr.mxu0 0.0
        %938 = vmatpush1.msra.mxu0 0.0
        %939 = vmatprep.subr.mxu0 0.0
        %940 = vmatpush1.msra.mxu0 0.0
        %941 = vmatprep.subr.mxu0 0.0
        %942 = vmatpush1.msra.mxu0 0.0
        %943 = vmatprep.mubr.f32.mxu0 0.0
        %v944 = vand.u32 %v839, 4294901760
        %v945 = vsub.f32 %v839, %v944
        %v946 = vand.u32 %v945, 4294901760
        %v947 = vsub.f32 %v945, %v946
        %v948 = vand.u32 %v947, 4294901760
        %949 = vmatmul.mubr.f32.gmra.mrb[0].mxu0 %v948
        %v950 = vpop.f32.mrb[0].mxu0
        %v951 = vadd.f32 %v861, %v950
        %v952 = vpop.f32.mrb[0].mxu0
        %953 = vdwg.mxu0
        %954 = vmatprep.subr.mxu0 0.0
        %v955 = vand.u32 %v840, 4294901760
        %v956 = vsub.f32 %v840, %v955
        %v957 = vand.u32 %v956, 4294901760
        %v958 = vsub.f32 %v956, %v957
        %v959 = vand.u32 %v958, 4294901760
        %960 = vmatpush1.msra.mxu0 %v959
        %961 = vmatprep.subr.mxu0 0.0
        %v962 = vand.u32 %v841, 4294901760
        %v963 = vsub.f32 %v841, %v962
        %v964 = vand.u32 %v963, 4294901760
        %v965 = vsub.f32 %v963, %v964
        %v966 = vand.u32 %v965, 4294901760
        %967 = vmatpush1.msra.mxu0 %v966
        %968 = vmatprep.subr.mxu0 0.0
        %v969 = vand.u32 %v842, 4294901760
        %v970 = vsub.f32 %v842, %v969
        %v971 = vand.u32 %v970, 4294901760
        %v972 = vsub.f32 %v970, %v971
        %v973 = vand.u32 %v972, 4294901760
        %974 = vmatpush1.msra.mxu0 %v973
        %975 = vmatprep.subr.mxu0 0.0
        %v976 = vand.u32 %v843, 4294901760
        %v977 = vsub.f32 %v843, %v976
        %v978 = vand.u32 %v977, 4294901760
        %v979 = vsub.f32 %v977, %v978
        %v980 = vand.u32 %v979, 4294901760
        %981 = vmatpush1.msra.mxu0 %v980
        %982 = vmatprep.subr.mxu0 0.0
        %v983 = vand.u32 %v844, 4294901760
        %v984 = vsub.f32 %v844, %v983
        %v985 = vand.u32 %v984, 4294901760
        %v986 = vsub.f32 %v984, %v985
        %v987 = vand.u32 %v986, 4294901760
        %988 = vmatpush1.msra.mxu0 %v987
        %989 = vmatprep.subr.mxu0 0.0
        %v990 = vand.u32 %v845, 4294901760
        %v991 = vsub.f32 %v845, %v990
        %v992 = vand.u32 %v991, 4294901760
        %v993 = vsub.f32 %v991, %v992
        %v994 = vand.u32 %v993, 4294901760
        %995 = vmatpush1.msra.mxu0 %v994
        %996 = vmatprep.subr.mxu0 0.0
        %v997 = vand.u32 %v846, 4294901760
        %v998 = vsub.f32 %v846, %v997
        %v999 = vand.u32 %v998, 4294901760
        %v1000 = vsub.f32 %v998, %v999
        %v1001 = vand.u32 %v1000, 4294901760
        %1002 = vmatpush1.msra.mxu0 %v1001
        %1003 = vmatprep.subr.mxu0 0.0
        %v1004 = vand.u32 %v847, 4294901760
        %v1005 = vsub.f32 %v847, %v1004
        %v1006 = vand.u32 %v1005, 4294901760
        %v1007 = vsub.f32 %v1005, %v1006
        %v1008 = vand.u32 %v1007, 4294901760
        %1009 = vmatpush1.msra.mxu0 %v1008
        %1010 = vmatprep.subr.mxu0 0.0
        %v1011 = vand.u32 %v848, 4294901760
        %v1012 = vsub.f32 %v848, %v1011
        %v1013 = vand.u32 %v1012, 4294901760
        %v1014 = vsub.f32 %v1012, %v1013
        %v1015 = vand.u32 %v1014, 4294901760
        %1016 = vmatpush1.msra.mxu0 %v1015
        %1017 = vmatprep.subr.mxu0 0.0
        %v1018 = vand.u32 %v849, 4294901760
        %v1019 = vsub.f32 %v849, %v1018
        %v1020 = vand.u32 %v1019, 4294901760
        %v1021 = vsub.f32 %v1019, %v1020
        %v1022 = vand.u32 %v1021, 4294901760
        %1023 = vmatpush1.msra.mxu0 %v1022
        %1024 = vmatprep.subr.mxu0 0.0
        %v1025 = vand.u32 %v850, 4294901760
        %v1026 = vsub.f32 %v850, %v1025
        %v1027 = vand.u32 %v1026, 4294901760
        %v1028 = vsub.f32 %v1026, %v1027
        %v1029 = vand.u32 %v1028, 4294901760
        %1030 = vmatpush1.msra.mxu0 %v1029
        %1031 = vmatprep.subr.mxu0 0.0
        %v1032 = vand.u32 %v851, 4294901760
        %v1033 = vsub.f32 %v851, %v1032
        %v1034 = vand.u32 %v1033, 4294901760
        %v1035 = vsub.f32 %v1033, %v1034
        %v1036 = vand.u32 %v1035, 4294901760
        %1037 = vmatpush1.msra.mxu0 %v1036
        %1038 = vmatprep.subr.mxu0 0.0
        %v1039 = vand.u32 %v852, 4294901760
        %v1040 = vsub.f32 %v852, %v1039
        %v1041 = vand.u32 %v1040, 4294901760
        %v1042 = vsub.f32 %v1040, %v1041
        %v1043 = vand.u32 %v1042, 4294901760
        %1044 = vmatpush1.msra.mxu0 %v1043
        %1045 = vmatprep.subr.mxu0 0.0
        %v1046 = vand.u32 %v853, 4294901760
        %v1047 = vsub.f32 %v853, %v1046
        %v1048 = vand.u32 %v1047, 4294901760
        %v1049 = vsub.f32 %v1047, %v1048
        %v1050 = vand.u32 %v1049, 4294901760
        %1051 = vmatpush1.msra.mxu0 %v1050
        %1052 = vmatprep.subr.mxu0 0.0
        %v1053 = vand.u32 %v854, 4294901760
        %v1054 = vsub.f32 %v854, %v1053
        %v1055 = vand.u32 %v1054, 4294901760
        %v1056 = vsub.f32 %v1054, %v1055
        %v1057 = vand.u32 %v1056, 4294901760
        %1058 = vmatpush1.msra.mxu0 %v1057
        %1059 = vmatprep.subr.mxu0 0.0
        %v1060 = vand.u32 %v855, 4294901760
        %v1061 = vsub.f32 %v855, %v1060
        %v1062 = vand.u32 %v1061, 4294901760
        %v1063 = vsub.f32 %v1061, %v1062
        %v1064 = vand.u32 %v1063, 4294901760
        %1065 = vmatpush1.msra.mxu0 %v1064
        %1066 = vmatprep.subr.mxu0 0.0
        %1067 = vmatpush1.msra.mxu0 0.0
        %1068 = vmatprep.subr.mxu0 0.0
        %1069 = vmatpush1.msra.mxu0 0.0
        %1070 = vmatprep.subr.mxu0 0.0
        %1071 = vmatpush1.msra.mxu0 0.0
        %1072 = vmatprep.subr.mxu0 0.0
        %1073 = vmatpush1.msra.mxu0 0.0
        %1074 = vmatprep.subr.mxu0 0.0
        %1075 = vmatpush1.msra.mxu0 0.0
        %1076 = vmatprep.subr.mxu0 0.0
        %1077 = vmatpush1.msra.mxu0 0.0
        %1078 = vmatprep.subr.mxu0 0.0
        %1079 = vmatpush1.msra.mxu0 0.0
        %1080 = vmatprep.subr.mxu0 0.0
        %1081 = vmatpush1.msra.mxu0 0.0
        %1082 = vmatprep.subr.mxu0 0.0
        %1083 = vmatpush1.msra.mxu0 0.0
        %1084 = vmatprep.subr.mxu0 0.0
        %1085 = vmatpush1.msra.mxu0 0.0
        %1086 = vmatprep.subr.mxu0 0.0
        %1087 = vmatpush1.msra.mxu0 0.0
        %1088 = vmatprep.subr.mxu0 0.0
        %1089 = vmatpush1.msra.mxu0 0.0
        %1090 = vmatprep.subr.mxu0 0.0
        %1091 = vmatpush1.msra.mxu0 0.0
        %1092 = vmatprep.subr.mxu0 0.0
        %1093 = vmatpush1.msra.mxu0 0.0
        %1094 = vmatprep.subr.mxu0 0.0
        %1095 = vmatpush1.msra.mxu0 0.0
        %1096 = vmatprep.subr.mxu0 0.0
        %1097 = vmatpush1.msra.mxu0 0.0
        %1098 = vmatprep.mubr.f32.mxu0 0.0
        %v1099 = vand.u32 %v839, 4294901760
        %1100 = vmatmul.mubr.f32.gmra.mrb[0].mxu0 %v1099
        %v1101 = vpop.f32.mrb[0].mxu0
        %v1102 = vadd.f32 %v951, %v1101
        %v1103 = vpop.f32.mrb[0].mxu0
        %1104 = vdwg.mxu0
        %1105 = vmatprep.subr.mxu0 0.0
        %v1106 = vand.u32 %v840, 4294901760
        %v1107 = vsub.f32 %v840, %v1106
        %1108 = vmatpush1.msra.mxu0 %v1107
        %1109 = vmatprep.subr.mxu0 0.0
        %v1110 = vand.u32 %v841, 4294901760
        %v1111 = vsub.f32 %v841, %v1110
        %1112 = vmatpush1.msra.mxu0 %v1111
        %1113 = vmatprep.subr.mxu0 0.0
        %v1114 = vand.u32 %v842, 4294901760
        %v1115 = vsub.f32 %v842, %v1114
        %1116 = vmatpush1.msra.mxu0 %v1115
        %1117 = vmatprep.subr.mxu0 0.0
        %v1118 = vand.u32 %v843, 4294901760
        %v1119 = vsub.f32 %v843, %v1118
        %1120 = vmatpush1.msra.mxu0 %v1119
        %1121 = vmatprep.subr.mxu0 0.0
        %v1122 = vand.u32 %v844, 4294901760
        %v1123 = vsub.f32 %v844, %v1122
        %1124 = vmatpush1.msra.mxu0 %v1123
        %1125 = vmatprep.subr.mxu0 0.0
        %v1126 = vand.u32 %v845, 4294901760
        %v1127 = vsub.f32 %v845, %v1126
        %1128 = vmatpush1.msra.mxu0 %v1127
        %1129 = vmatprep.subr.mxu0 0.0
        %v1130 = vand.u32 %v846, 4294901760
        %v1131 = vsub.f32 %v846, %v1130
        %1132 = vmatpush1.msra.mxu0 %v1131
        %1133 = vmatprep.subr.mxu0 0.0
        %v1134 = vand.u32 %v847, 4294901760
        %v1135 = vsub.f32 %v847, %v1134
        %1136 = vmatpush1.msra.mxu0 %v1135
        %1137 = vmatprep.subr.mxu0 0.0
        %v1138 = vand.u32 %v848, 4294901760
        %v1139 = vsub.f32 %v848, %v1138
        %1140 = vmatpush1.msra.mxu0 %v1139
        %1141 = vmatprep.subr.mxu0 0.0
        %v1142 = vand.u32 %v849, 4294901760
        %v1143 = vsub.f32 %v849, %v1142
        %1144 = vmatpush1.msra.mxu0 %v1143
        %1145 = vmatprep.subr.mxu0 0.0
        %v1146 = vand.u32 %v850, 4294901760
        %v1147 = vsub.f32 %v850, %v1146
        %1148 = vmatpush1.msra.mxu0 %v1147
        %1149 = vmatprep.subr.mxu0 0.0
        %v1150 = vand.u32 %v851, 4294901760
        %v1151 = vsub.f32 %v851, %v1150
        %1152 = vmatpush1.msra.mxu0 %v1151
        %1153 = vmatprep.subr.mxu0 0.0
        %v1154 = vand.u32 %v852, 4294901760
        %v1155 = vsub.f32 %v852, %v1154
        %1156 = vmatpush1.msra.mxu0 %v1155
        %1157 = vmatprep.subr.mxu0 0.0
        %v1158 = vand.u32 %v853, 4294901760
        %v1159 = vsub.f32 %v853, %v1158
        %1160 = vmatpush1.msra.mxu0 %v1159
        %1161 = vmatprep.subr.mxu0 0.0
        %v1162 = vand.u32 %v854, 4294901760
        %v1163 = vsub.f32 %v854, %v1162
        %1164 = vmatpush1.msra.mxu0 %v1163
        %1165 = vmatprep.subr.mxu0 0.0
        %v1166 = vand.u32 %v855, 4294901760
        %v1167 = vsub.f32 %v855, %v1166
        %1168 = vmatpush1.msra.mxu0 %v1167
        %1169 = vmatprep.subr.mxu0 0.0
        %1170 = vmatpush1.msra.mxu0 0.0
        %1171 = vmatprep.subr.mxu0 0.0
        %1172 = vmatpush1.msra.mxu0 0.0
        %1173 = vmatprep.subr.mxu0 0.0
        %1174 = vmatpush1.msra.mxu0 0.0
        %1175 = vmatprep.subr.mxu0 0.0
        %1176 = vmatpush1.msra.mxu0 0.0
        %1177 = vmatprep.subr.mxu0 0.0
        %1178 = vmatpush1.msra.mxu0 0.0
        %1179 = vmatprep.subr.mxu0 0.0
        %1180 = vmatpush1.msra.mxu0 0.0
        %1181 = vmatprep.subr.mxu0 0.0
        %1182 = vmatpush1.msra.mxu0 0.0
        %1183 = vmatprep.subr.mxu0 0.0
        %1184 = vmatpush1.msra.mxu0 0.0
        %1185 = vmatprep.subr.mxu0 0.0
        %1186 = vmatpush1.msra.mxu0 0.0
        %1187 = vmatprep.subr.mxu0 0.0
        %1188 = vmatpush1.msra.mxu0 0.0
        %1189 = vmatprep.subr.mxu0 0.0
        %1190 = vmatpush1.msra.mxu0 0.0
        %1191 = vmatprep.subr.mxu0 0.0
        %1192 = vmatpush1.msra.mxu0 0.0
        %1193 = vmatprep.subr.mxu0 0.0
        %1194 = vmatpush1.msra.mxu0 0.0
        %1195 = vmatprep.subr.mxu0 0.0
        %1196 = vmatpush1.msra.mxu0 0.0
        %1197 = vmatprep.subr.mxu0 0.0
        %1198 = vmatpush1.msra.mxu0 0.0
        %1199 = vmatprep.subr.mxu0 0.0
        %1200 = vmatpush1.msra.mxu0 0.0
        %1201 = vmatprep.mubr.f32.mxu0 0.0
        %v1202 = vand.u32 %v839, 4294901760
        %v1203 = vsub.f32 %v839, %v1202
        %1204 = vmatmul.mubr.f32.gmra.mrb[0].mxu0 %v1203
        %v1205 = vpop.f32.mrb[0].mxu0
        %v1206 = vadd.f32 %v1102, %v1205
        %v1207 = vpop.f32.mrb[0].mxu0
        %1208 = vdwg.mxu0
        %1209 = vmatprep.subr.mxu0 0.0
        %v1210 = vand.u32 %v840, 4294901760
        %1211 = vmatpush1.msra.mxu0 %v1210
        %1212 = vmatprep.subr.mxu0 0.0
        %v1213 = vand.u32 %v841, 4294901760
        %1214 = vmatpush1.msra.mxu0 %v1213
        %1215 = vmatprep.subr.mxu0 0.0
        %v1216 = vand.u32 %v842, 4294901760
        %1217 = vmatpush1.msra.mxu0 %v1216
        %1218 = vmatprep.subr.mxu0 0.0
        %v1219 = vand.u32 %v843, 4294901760
        %1220 = vmatpush1.msra.mxu0 %v1219
        %1221 = vmatprep.subr.mxu0 0.0
        %v1222 = vand.u32 %v844, 4294901760
        %1223 = vmatpush1.msra.mxu0 %v1222
        %1224 = vmatprep.subr.mxu0 0.0
        %v1225 = vand.u32 %v845, 4294901760
        %1226 = vmatpush1.msra.mxu0 %v1225
        %1227 = vmatprep.subr.mxu0 0.0
        %v1228 = vand.u32 %v846, 4294901760
        %1229 = vmatpush1.msra.mxu0 %v1228
        %1230 = vmatprep.subr.mxu0 0.0
        %v1231 = vand.u32 %v847, 4294901760
        %1232 = vmatpush1.msra.mxu0 %v1231
        %1233 = vmatprep.subr.mxu0 0.0
        %v1234 = vand.u32 %v848, 4294901760
        %1235 = vmatpush1.msra.mxu0 %v1234
        %1236 = vmatprep.subr.mxu0 0.0
        %v1237 = vand.u32 %v849, 4294901760
        %1238 = vmatpush1.msra.mxu0 %v1237
        %1239 = vmatprep.subr.mxu0 0.0
        %v1240 = vand.u32 %v850, 4294901760
        %1241 = vmatpush1.msra.mxu0 %v1240
        %1242 = vmatprep.subr.mxu0 0.0
        %v1243 = vand.u32 %v851, 4294901760
        %1244 = vmatpush1.msra.mxu0 %v1243
        %1245 = vmatprep.subr.mxu0 0.0
        %v1246 = vand.u32 %v852, 4294901760
        %1247 = vmatpush1.msra.mxu0 %v1246
        %1248 = vmatprep.subr.mxu0 0.0
        %v1249 = vand.u32 %v853, 4294901760
        %1250 = vmatpush1.msra.mxu0 %v1249
        %1251 = vmatprep.subr.mxu0 0.0
        %v1252 = vand.u32 %v854, 4294901760
        %1253 = vmatpush1.msra.mxu0 %v1252
        %1254 = vmatprep.subr.mxu0 0.0
        %v1255 = vand.u32 %v855, 4294901760
        %1256 = vmatpush1.msra.mxu0 %v1255
        %1257 = vmatprep.subr.mxu0 0.0
        %1258 = vmatpush1.msra.mxu0 0.0
        %1259 = vmatprep.subr.mxu0 0.0
        %1260 = vmatpush1.msra.mxu0 0.0
        %1261 = vmatprep.subr.mxu0 0.0
        %1262 = vmatpush1.msra.mxu0 0.0
        %1263 = vmatprep.subr.mxu0 0.0
        %1264 = vmatpush1.msra.mxu0 0.0
        %1265 = vmatprep.subr.mxu0 0.0
        %1266 = vmatpush1.msra.mxu0 0.0
        %1267 = vmatprep.subr.mxu0 0.0
        %1268 = vmatpush1.msra.mxu0 0.0
        %1269 = vmatprep.subr.mxu0 0.0
        %1270 = vmatpush1.msra.mxu0 0.0
        %1271 = vmatprep.subr.mxu0 0.0
        %1272 = vmatpush1.msra.mxu0 0.0
        %1273 = vmatprep.subr.mxu0 0.0
        %1274 = vmatpush1.msra.mxu0 0.0
        %1275 = vmatprep.subr.mxu0 0.0
        %1276 = vmatpush1.msra.mxu0 0.0
        %1277 = vmatprep.subr.mxu0 0.0
        %1278 = vmatpush1.msra.mxu0 0.0
        %1279 = vmatprep.subr.mxu0 0.0
        %1280 = vmatpush1.msra.mxu0 0.0
        %1281 = vmatprep.subr.mxu0 0.0
        %1282 = vmatpush1.msra.mxu0 0.0
        %1283 = vmatprep.subr.mxu0 0.0
        %1284 = vmatpush1.msra.mxu0 0.0
        %1285 = vmatprep.subr.mxu0 0.0
        %1286 = vmatpush1.msra.mxu0 0.0
        %1287 = vmatprep.subr.mxu0 0.0
        %1288 = vmatpush1.msra.mxu0 0.0
        %1289 = vmatprep.mubr.f32.mxu0 0.0
        %v1290 = vand.u32 %v839, 4294901760
        %v1291 = vsub.f32 %v839, %v1290
        %v1292 = vand.u32 %v1291, 4294901760
        %1293 = vmatmul.mubr.f32.gmra.mrb[0].mxu0 %v1292
        %v1294 = vpop.f32.mrb[0].mxu0
        %v1295 = vadd.f32 %v1206, %v1294
        %v1296 = vpop.f32.mrb[0].mxu0
        %1297 = vdwg.mxu0
        %1298 = vmatprep.subr.mxu0 0.0
        %v1299 = vand.u32 %v840, 4294901760
        %v1300 = vsub.f32 %v840, %v1299
        %v1301 = vand.u32 %v1300, 4294901760
        %1302 = vmatpush1.msra.mxu0 %v1301
        %1303 = vmatprep.subr.mxu0 0.0
        %v1304 = vand.u32 %v841, 4294901760
        %v1305 = vsub.f32 %v841, %v1304
        %v1306 = vand.u32 %v1305, 4294901760
        %1307 = vmatpush1.msra.mxu0 %v1306
        %1308 = vmatprep.subr.mxu0 0.0
        %v1309 = vand.u32 %v842, 4294901760
        %v1310 = vsub.f32 %v842, %v1309
        %v1311 = vand.u32 %v1310, 4294901760
        %1312 = vmatpush1.msra.mxu0 %v1311
        %1313 = vmatprep.subr.mxu0 0.0
        %v1314 = vand.u32 %v843, 4294901760
        %v1315 = vsub.f32 %v843, %v1314
        %v1316 = vand.u32 %v1315, 4294901760
        %1317 = vmatpush1.msra.mxu0 %v1316
        %1318 = vmatprep.subr.mxu0 0.0
        %v1319 = vand.u32 %v844, 4294901760
        %v1320 = vsub.f32 %v844, %v1319
        %v1321 = vand.u32 %v1320, 4294901760
        %1322 = vmatpush1.msra.mxu0 %v1321
        %1323 = vmatprep.subr.mxu0 0.0
        %v1324 = vand.u32 %v845, 4294901760
        %v1325 = vsub.f32 %v845, %v1324
        %v1326 = vand.u32 %v1325, 4294901760
        %1327 = vmatpush1.msra.mxu0 %v1326
        %1328 = vmatprep.subr.mxu0 0.0
        %v1329 = vand.u32 %v846, 4294901760
        %v1330 = vsub.f32 %v846, %v1329
        %v1331 = vand.u32 %v1330, 4294901760
        %1332 = vmatpush1.msra.mxu0 %v1331
        %1333 = vmatprep.subr.mxu0 0.0
        %v1334 = vand.u32 %v847, 4294901760
        %v1335 = vsub.f32 %v847, %v1334
        %v1336 = vand.u32 %v1335, 4294901760
        %1337 = vmatpush1.msra.mxu0 %v1336
        %1338 = vmatprep.subr.mxu0 0.0
        %v1339 = vand.u32 %v848, 4294901760
        %v1340 = vsub.f32 %v848, %v1339
        %v1341 = vand.u32 %v1340, 4294901760
        %1342 = vmatpush1.msra.mxu0 %v1341
        %1343 = vmatprep.subr.mxu0 0.0
        %v1344 = vand.u32 %v849, 4294901760
        %v1345 = vsub.f32 %v849, %v1344
        %v1346 = vand.u32 %v1345, 4294901760
        %1347 = vmatpush1.msra.mxu0 %v1346
        %1348 = vmatprep.subr.mxu0 0.0
        %v1349 = vand.u32 %v850, 4294901760
        %v1350 = vsub.f32 %v850, %v1349
        %v1351 = vand.u32 %v1350, 4294901760
        %1352 = vmatpush1.msra.mxu0 %v1351
        %1353 = vmatprep.subr.mxu0 0.0
        %v1354 = vand.u32 %v851, 4294901760
        %v1355 = vsub.f32 %v851, %v1354
        %v1356 = vand.u32 %v1355, 4294901760
        %1357 = vmatpush1.msra.mxu0 %v1356
        %1358 = vmatprep.subr.mxu0 0.0
        %v1359 = vand.u32 %v852, 4294901760
        %v1360 = vsub.f32 %v852, %v1359
        %v1361 = vand.u32 %v1360, 4294901760
        %1362 = vmatpush1.msra.mxu0 %v1361
        %1363 = vmatprep.subr.mxu0 0.0
        %v1364 = vand.u32 %v853, 4294901760
        %v1365 = vsub.f32 %v853, %v1364
        %v1366 = vand.u32 %v1365, 4294901760
        %1367 = vmatpush1.msra.mxu0 %v1366
        %1368 = vmatprep.subr.mxu0 0.0
        %v1369 = vand.u32 %v854, 4294901760
        %v1370 = vsub.f32 %v854, %v1369
        %v1371 = vand.u32 %v1370, 4294901760
        %1372 = vmatpush1.msra.mxu0 %v1371
        %1373 = vmatprep.subr.mxu0 0.0
        %v1374 = vand.u32 %v855, 4294901760
        %v1375 = vsub.f32 %v855, %v1374
        %v1376 = vand.u32 %v1375, 4294901760
        %1377 = vmatpush1.msra.mxu0 %v1376
        %1378 = vmatprep.subr.mxu0 0.0
        %1379 = vmatpush1.msra.mxu0 0.0
        %1380 = vmatprep.subr.mxu0 0.0
        %1381 = vmatpush1.msra.mxu0 0.0
        %1382 = vmatprep.subr.mxu0 0.0
        %1383 = vmatpush1.msra.mxu0 0.0
        %1384 = vmatprep.subr.mxu0 0.0
        %1385 = vmatpush1.msra.mxu0 0.0
        %1386 = vmatprep.subr.mxu0 0.0
        %1387 = vmatpush1.msra.mxu0 0.0
        %1388 = vmatprep.subr.mxu0 0.0
        %1389 = vmatpush1.msra.mxu0 0.0
        %1390 = vmatprep.subr.mxu0 0.0
        %1391 = vmatpush1.msra.mxu0 0.0
        %1392 = vmatprep.subr.mxu0 0.0
        %1393 = vmatpush1.msra.mxu0 0.0
        %1394 = vmatprep.subr.mxu0 0.0
        %1395 = vmatpush1.msra.mxu0 0.0
        %1396 = vmatprep.subr.mxu0 0.0
        %1397 = vmatpush1.msra.mxu0 0.0
        %1398 = vmatprep.subr.mxu0 0.0
        %1399 = vmatpush1.msra.mxu0 0.0
        %1400 = vmatprep.subr.mxu0 0.0
        %1401 = vmatpush1.msra.mxu0 0.0
        %1402 = vmatprep.subr.mxu0 0.0
        %1403 = vmatpush1.msra.mxu0 0.0
        %1404 = vmatprep.subr.mxu0 0.0
        %1405 = vmatpush1.msra.mxu0 0.0
        %1406 = vmatprep.subr.mxu0 0.0
        %1407 = vmatpush1.msra.mxu0 0.0
        %1408 = vmatprep.subr.mxu0 0.0
        %1409 = vmatpush1.msra.mxu0 0.0
        %1410 = vmatprep.mubr.f32.mxu0 0.0
        %v1411 = vand.u32 %v839, 4294901760
        %1412 = vmatmul.mubr.f32.gmra.mrb[0].mxu0 %v1411
        %v1413 = vpop.f32.mrb[0].mxu0
        %v1414 = vadd.f32 %v1295, %v1413
        %v1415 = vpop.f32.mrb[0].mxu0
        %1416 = vdwg.mxu0
        %1417 = vmatprep.subr.mxu0 0.0
        %v1418 = vand.u32 %v840, 4294901760
        %1419 = vmatpush1.msra.mxu0 %v1418
        %1420 = vmatprep.subr.mxu0 0.0
        %v1421 = vand.u32 %v841, 4294901760
        %1422 = vmatpush1.msra.mxu0 %v1421
        %1423 = vmatprep.subr.mxu0 0.0
        %v1424 = vand.u32 %v842, 4294901760
        %1425 = vmatpush1.msra.mxu0 %v1424
        %1426 = vmatprep.subr.mxu0 0.0
        %v1427 = vand.u32 %v843, 4294901760
        %1428 = vmatpush1.msra.mxu0 %v1427
        %1429 = vmatprep.subr.mxu0 0.0
        %v1430 = vand.u32 %v844, 4294901760
        %1431 = vmatpush1.msra.mxu0 %v1430
        %1432 = vmatprep.subr.mxu0 0.0
        %v1433 = vand.u32 %v845, 4294901760
        %1434 = vmatpush1.msra.mxu0 %v1433
        %1435 = vmatprep.subr.mxu0 0.0
        %v1436 = vand.u32 %v846, 4294901760
        %1437 = vmatpush1.msra.mxu0 %v1436
        %1438 = vmatprep.subr.mxu0 0.0
        %v1439 = vand.u32 %v847, 4294901760
        %1440 = vmatpush1.msra.mxu0 %v1439
        %1441 = vmatprep.subr.mxu0 0.0
        %v1442 = vand.u32 %v848, 4294901760
        %1443 = vmatpush1.msra.mxu0 %v1442
        %1444 = vmatprep.subr.mxu0 0.0
        %v1445 = vand.u32 %v849, 4294901760
        %1446 = vmatpush1.msra.mxu0 %v1445
        %1447 = vmatprep.subr.mxu0 0.0
        %v1448 = vand.u32 %v850, 4294901760
        %1449 = vmatpush1.msra.mxu0 %v1448
        %1450 = vmatprep.subr.mxu0 0.0
        %v1451 = vand.u32 %v851, 4294901760
        %1452 = vmatpush1.msra.mxu0 %v1451
        %1453 = vmatprep.subr.mxu0 0.0
        %v1454 = vand.u32 %v852, 4294901760
        %1455 = vmatpush1.msra.mxu0 %v1454
        %1456 = vmatprep.subr.mxu0 0.0
        %v1457 = vand.u32 %v853, 4294901760
        %1458 = vmatpush1.msra.mxu0 %v1457
        %1459 = vmatprep.subr.mxu0 0.0
        %v1460 = vand.u32 %v854, 4294901760
        %1461 = vmatpush1.msra.mxu0 %v1460
        %1462 = vmatprep.subr.mxu0 0.0
        %v1463 = vand.u32 %v855, 4294901760
        %1464 = vmatpush1.msra.mxu0 %v1463
        %1465 = vmatprep.subr.mxu0 0.0
        %1466 = vmatpush1.msra.mxu0 0.0
        %1467 = vmatprep.subr.mxu0 0.0
        %1468 = vmatpush1.msra.mxu0 0.0
        %1469 = vmatprep.subr.mxu0 0.0
        %1470 = vmatpush1.msra.mxu0 0.0
        %1471 = vmatprep.subr.mxu0 0.0
        %1472 = vmatpush1.msra.mxu0 0.0
        %1473 = vmatprep.subr.mxu0 0.0
        %1474 = vmatpush1.msra.mxu0 0.0
        %1475 = vmatprep.subr.mxu0 0.0
        %1476 = vmatpush1.msra.mxu0 0.0
        %1477 = vmatprep.subr.mxu0 0.0
        %1478 = vmatpush1.msra.mxu0 0.0
        %1479 = vmatprep.subr.mxu0 0.0
        %1480 = vmatpush1.msra.mxu0 0.0
        %1481 = vmatprep.subr.mxu0 0.0
        %1482 = vmatpush1.msra.mxu0 0.0
        %1483 = vmatprep.subr.mxu0 0.0
        %1484 = vmatpush1.msra.mxu0 0.0
        %1485 = vmatprep.subr.mxu0 0.0
        %1486 = vmatpush1.msra.mxu0 0.0
        %1487 = vmatprep.subr.mxu0 0.0
        %1488 = vmatpush1.msra.mxu0 0.0
        %1489 = vmatprep.subr.mxu0 0.0
        %1490 = vmatpush1.msra.mxu0 0.0
        %1491 = vmatprep.subr.mxu0 0.0
        %1492 = vmatpush1.msra.mxu0 0.0
        %1493 = vmatprep.subr.mxu0 0.0
        %1494 = vmatpush1.msra.mxu0 0.0
        %1495 = vmatprep.subr.mxu0 0.0
        %1496 = vmatpush1.msra.mxu0 0.0
        %1497 = vmatprep.mubr.f32.mxu0 0.0
        %v1498 = vand.u32 %v839, 4294901760
        %1499 = vmatmul.mubr.f32.gmra.mrb[0].mxu0 %v1498
        %v1500 = vpop.f32.mrb[0].mxu0
        %v1501 = vadd.f32 %v1414, %v1500
        %v1502 = vpop.f32.mrb[0].mxu0
        %1503 = vdwg.mxu0
        %v1504 = vxor.u32 %v1501, 2147483648
        %v1505 = vmul.f32 %v1504, 1.442695
        %v1506 = vpow.pop %v1505
        %v1507 = vadd.f32 %v1506, 1.0
        %v1508 = vrcp.pop %v1507
        %v1509 = vmul.f32 1.0, %v1508
        %v1510 = vmul.f32 %v1501, %v1509
        %v1511 = vld [vmem:[%s7] sm:$0xff]
        %v1512 = vld [vmem:[%s7 + $0x8] sm:$0xff]
        %v1513 = vld [vmem:[%s7 + $0x10] sm:$0xff]
        %v1514 = vld [vmem:[%s7 + $0x18] sm:$0xff]
        %v1515 = vld [vmem:[%s7 + $0x20] sm:$0xff]
        %v1516 = vld [vmem:[%s7 + $0x28] sm:$0xff]
        %v1517 = vld [vmem:[%s7 + $0x30] sm:$0xff]
        %v1518 = vld [vmem:[%s7 + $0x38] sm:$0xff]
        %v1519 = vld [vmem:[%s7 + $0x40] sm:$0xff]
        %v1520 = vld [vmem:[%s7 + $0x48] sm:$0xff]
        %v1521 = vld [vmem:[%s7 + $0x50] sm:$0xff]
        %v1522 = vld [vmem:[%s7 + $0x58] sm:$0xff]
        %v1523 = vld [vmem:[%s7 + $0x60] sm:$0xff]
        %v1524 = vld [vmem:[%s7 + $0x68] sm:$0xff]
        %v1525 = vld [vmem:[%s7 + $0x70] sm:$0xff]
        %v1526 = vld [vmem:[%s7 + $0x78] sm:$0xff]
        %v1527 = vld [vmem:[%s8] sm:$0x1]
        %v1529 = vlaneseq
        %v1530 = vshrl.u32 %v1529, 7
        %v1531 = vsub.s32 0, %v1530
        %v1532 = vrot.slane %v1527, %v1531
        %1534 = vmatprep.subr.mxu0 0.0
        %v1535 = vand.u32 %v1511, 4294901760
        %1536 = vmatpush1.msra.mxu0 %v1535
        %1537 = vmatprep.subr.mxu0 0.0
        %v1538 = vand.u32 %v1512, 4294901760
        %1539 = vmatpush1.msra.mxu0 %v1538
        %1540 = vmatprep.subr.mxu0 0.0
        %v1541 = vand.u32 %v1513, 4294901760
        %1542 = vmatpush1.msra.mxu0 %v1541
        %1543 = vmatprep.subr.mxu0 0.0
        %v1544 = vand.u32 %v1514, 4294901760
        %1545 = vmatpush1.msra.mxu0 %v1544
        %1546 = vmatprep.subr.mxu0 0.0
        %v1547 = vand.u32 %v1515, 4294901760
        %1548 = vmatpush1.msra.mxu0 %v1547
        %1549 = vmatprep.subr.mxu0 0.0
        %v1550 = vand.u32 %v1516, 4294901760
        %1551 = vmatpush1.msra.mxu0 %v1550
        %1552 = vmatprep.subr.mxu0 0.0
        %v1553 = vand.u32 %v1517, 4294901760
        %1554 = vmatpush1.msra.mxu0 %v1553
        %1555 = vmatprep.subr.mxu0 0.0
        %v1556 = vand.u32 %v1518, 4294901760
        %1557 = vmatpush1.msra.mxu0 %v1556
        %1558 = vmatprep.subr.mxu0 0.0
        %v1559 = vand.u32 %v1519, 4294901760
        %1560 = vmatpush1.msra.mxu0 %v1559
        %1561 = vmatprep.subr.mxu0 0.0
        %v1562 = vand.u32 %v1520, 4294901760
        %1563 = vmatpush1.msra.mxu0 %v1562
        %1564 = vmatprep.subr.mxu0 0.0
        %v1565 = vand.u32 %v1521, 4294901760
        %1566 = vmatpush1.msra.mxu0 %v1565
        %1567 = vmatprep.subr.mxu0 0.0
        %v1568 = vand.u32 %v1522, 4294901760
        %1569 = vmatpush1.msra.mxu0 %v1568
        %1570 = vmatprep.subr.mxu0 0.0
        %v1571 = vand.u32 %v1523, 4294901760
        %1572 = vmatpush1.msra.mxu0 %v1571
        %1573 = vmatprep.subr.mxu0 0.0
        %v1574 = vand.u32 %v1524, 4294901760
        %1575 = vmatpush1.msra.mxu0 %v1574
        %1576 = vmatprep.subr.mxu0 0.0
        %v1577 = vand.u32 %v1525, 4294901760
        %1578 = vmatpush1.msra.mxu0 %v1577
        %1579 = vmatprep.subr.mxu0 0.0
        %v1580 = vand.u32 %v1526, 4294901760
        %1581 = vmatpush1.msra.mxu0 %v1580
        %1582 = vmatprep.subr.mxu0 0.0
        %1583 = vmatpush1.msra.mxu0 0.0
        %1584 = vmatprep.subr.mxu0 0.0
        %1585 = vmatpush1.msra.mxu0 0.0
        %1586 = vmatprep.subr.mxu0 0.0
        %1587 = vmatpush1.msra.mxu0 0.0
        %1588 = vmatprep.subr.mxu0 0.0
        %1589 = vmatpush1.msra.mxu0 0.0
        %1590 = vmatprep.subr.mxu0 0.0
        %1591 = vmatpush1.msra.mxu0 0.0
        %1592 = vmatprep.subr.mxu0 0.0
        %1593 = vmatpush1.msra.mxu0 0.0
        %1594 = vmatprep.subr.mxu0 0.0
        %1595 = vmatpush1.msra.mxu0 0.0
        %1596 = vmatprep.subr.mxu0 0.0
        %1597 = vmatpush1.msra.mxu0 0.0
        %1598 = vmatprep.subr.mxu0 0.0
        %1599 = vmatpush1.msra.mxu0 0.0
        %1600 = vmatprep.subr.mxu0 0.0
        %1601 = vmatpush1.msra.mxu0 0.0
        %1602 = vmatprep.subr.mxu0 0.0
        %1603 = vmatpush1.msra.mxu0 0.0
        %1604 = vmatprep.subr.mxu0 0.0
        %1605 = vmatpush1.msra.mxu0 0.0
        %1606 = vmatprep.subr.mxu0 0.0
        %1607 = vmatpush1.msra.mxu0 0.0
        %1608 = vmatprep.subr.mxu0 0.0
        %1609 = vmatpush1.msra.mxu0 0.0
        %1610 = vmatprep.subr.mxu0 0.0
        %1611 = vmatpush1.msra.mxu0 0.0
        %1612 = vmatprep.subr.mxu0 0.0
        %1613 = vmatpush1.msra.mxu0 0.0
        %1614 = vmatprep.mubr.f32.mxu0 0.0
        %v1615 = vand.u32 %v1510, 4294901760
        %v1616 = vsub.f32 %v1510, %v1615
        %v1617 = vand.u32 %v1616, 4294901760
        %v1618 = vsub.f32 %v1616, %v1617
        %v1619 = vand.u32 %v1618, 4294901760
        %1620 = vmatmul.mubr.f32.gmra.mrb[0].mxu0 %v1619
        %v1621 = vpop.f32.mrb[0].mxu0
        %v1622 = vadd.f32 %v1532, %v1621
        %v1623 = vpop.f32.mrb[0].mxu0
        %1624 = vdwg.mxu0
        %1625 = vmatprep.subr.mxu0 0.0
        %v1626 = vand.u32 %v1511, 4294901760
        %v1627 = vsub.f32 %v1511, %v1626
        %v1628 = vand.u32 %v1627, 4294901760
        %v1629 = vsub.f32 %v1627, %v1628
        %v1630 = vand.u32 %v1629, 4294901760
        %1631 = vmatpush1.msra.mxu0 %v1630
        %1632 = vmatprep.subr.mxu0 0.0
        %v1633 = vand.u32 %v1512, 4294901760
        %v1634 = vsub.f32 %v1512, %v1633
        %v1635 = vand.u32 %v1634, 4294901760
        %v1636 = vsub.f32 %v1634, %v1635
        %v1637 = vand.u32 %v1636, 4294901760
        %1638 = vmatpush1.msra.mxu0 %v1637
        %1639 = vmatprep.subr.mxu0 0.0
        %v1640 = vand.u32 %v1513, 4294901760
        %v1641 = vsub.f32 %v1513, %v1640
        %v1642 = vand.u32 %v1641, 4294901760
        %v1643 = vsub.f32 %v1641, %v1642
        %v1644 = vand.u32 %v1643, 4294901760
        %1645 = vmatpush1.msra.mxu0 %v1644
        %1646 = vmatprep.subr.mxu0 0.0
        %v1647 = vand.u32 %v1514, 4294901760
        %v1648 = vsub.f32 %v1514, %v1647
        %v1649 = vand.u32 %v1648, 4294901760
        %v1650 = vsub.f32 %v1648, %v1649
        %v1651 = vand.u32 %v1650, 4294901760
        %1652 = vmatpush1.msra.mxu0 %v1651
        %1653 = vmatprep.subr.mxu0 0.0
        %v1654 = vand.u32 %v1515, 4294901760
        %v1655 = vsub.f32 %v1515, %v1654
        %v1656 = vand.u32 %v1655, 4294901760
        %v1657 = vsub.f32 %v1655, %v1656
        %v1658 = vand.u32 %v1657, 4294901760
        %1659 = vmatpush1.msra.mxu0 %v1658
        %1660 = vmatprep.subr.mxu0 0.0
        %v1661 = vand.u32 %v1516, 4294901760
        %v1662 = vsub.f32 %v1516, %v1661
        %v1663 = vand.u32 %v1662, 4294901760
        %v1664 = vsub.f32 %v1662, %v1663
        %v1665 = vand.u32 %v1664, 4294901760
        %1666 = vmatpush1.msra.mxu0 %v1665
        %1667 = vmatprep.subr.mxu0 0.0
        %v1668 = vand.u32 %v1517, 4294901760
        %v1669 = vsub.f32 %v1517, %v1668
        %v1670 = vand.u32 %v1669, 4294901760
        %v1671 = vsub.f32 %v1669, %v1670
        %v1672 = vand.u32 %v1671, 4294901760
        %1673 = vmatpush1.msra.mxu0 %v1672
        %1674 = vmatprep.subr.mxu0 0.0
        %v1675 = vand.u32 %v1518, 4294901760
        %v1676 = vsub.f32 %v1518, %v1675
        %v1677 = vand.u32 %v1676, 4294901760
        %v1678 = vsub.f32 %v1676, %v1677
        %v1679 = vand.u32 %v1678, 4294901760
        %1680 = vmatpush1.msra.mxu0 %v1679
        %1681 = vmatprep.subr.mxu0 0.0
        %v1682 = vand.u32 %v1519, 4294901760
        %v1683 = vsub.f32 %v1519, %v1682
        %v1684 = vand.u32 %v1683, 4294901760
        %v1685 = vsub.f32 %v1683, %v1684
        %v1686 = vand.u32 %v1685, 4294901760
        %1687 = vmatpush1.msra.mxu0 %v1686
        %1688 = vmatprep.subr.mxu0 0.0
        %v1689 = vand.u32 %v1520, 4294901760
        %v1690 = vsub.f32 %v1520, %v1689
        %v1691 = vand.u32 %v1690, 4294901760
        %v1692 = vsub.f32 %v1690, %v1691
        %v1693 = vand.u32 %v1692, 4294901760
        %1694 = vmatpush1.msra.mxu0 %v1693
        %1695 = vmatprep.subr.mxu0 0.0
        %v1696 = vand.u32 %v1521, 4294901760
        %v1697 = vsub.f32 %v1521, %v1696
        %v1698 = vand.u32 %v1697, 4294901760
        %v1699 = vsub.f32 %v1697, %v1698
        %v1700 = vand.u32 %v1699, 4294901760
        %1701 = vmatpush1.msra.mxu0 %v1700
        %1702 = vmatprep.subr.mxu0 0.0
        %v1703 = vand.u32 %v1522, 4294901760
        %v1704 = vsub.f32 %v1522, %v1703
        %v1705 = vand.u32 %v1704, 4294901760
        %v1706 = vsub.f32 %v1704, %v1705
        %v1707 = vand.u32 %v1706, 4294901760
        %1708 = vmatpush1.msra.mxu0 %v1707
        %1709 = vmatprep.subr.mxu0 0.0
        %v1710 = vand.u32 %v1523, 4294901760
        %v1711 = vsub.f32 %v1523, %v1710
        %v1712 = vand.u32 %v1711, 4294901760
        %v1713 = vsub.f32 %v1711, %v1712
        %v1714 = vand.u32 %v1713, 4294901760
        %1715 = vmatpush1.msra.mxu0 %v1714
        %1716 = vmatprep.subr.mxu0 0.0
        %v1717 = vand.u32 %v1524, 4294901760
        %v1718 = vsub.f32 %v1524, %v1717
        %v1719 = vand.u32 %v1718, 4294901760
        %v1720 = vsub.f32 %v1718, %v1719
        %v1721 = vand.u32 %v1720, 4294901760
        %1722 = vmatpush1.msra.mxu0 %v1721
        %1723 = vmatprep.subr.mxu0 0.0
        %v1724 = vand.u32 %v1525, 4294901760
        %v1725 = vsub.f32 %v1525, %v1724
        %v1726 = vand.u32 %v1725, 4294901760
        %v1727 = vsub.f32 %v1725, %v1726
        %v1728 = vand.u32 %v1727, 4294901760
        %1729 = vmatpush1.msra.mxu0 %v1728
        %1730 = vmatprep.subr.mxu0 0.0
        %v1731 = vand.u32 %v1526, 4294901760
        %v1732 = vsub.f32 %v1526, %v1731
        %v1733 = vand.u32 %v1732, 4294901760
        %v1734 = vsub.f32 %v1732, %v1733
        %v1735 = vand.u32 %v1734, 4294901760
        %1736 = vmatpush1.msra.mxu0 %v1735
        %1737 = vmatprep.subr.mxu0 0.0
        %1738 = vmatpush1.msra.mxu0 0.0
        %1739 = vmatprep.subr.mxu0 0.0
        %1740 = vmatpush1.msra.mxu0 0.0
        %1741 = vmatprep.subr.mxu0 0.0
        %1742 = vmatpush1.msra.mxu0 0.0
        %1743 = vmatprep.subr.mxu0 0.0
        %1744 = vmatpush1.msra.mxu0 0.0
        %1745 = vmatprep.subr.mxu0 0.0
        %1746 = vmatpush1.msra.mxu0 0.0
        %1747 = vmatprep.subr.mxu0 0.0
        %1748 = vmatpush1.msra.mxu0 0.0
        %1749 = vmatprep.subr.mxu0 0.0
        %1750 = vmatpush1.msra.mxu0 0.0
        %1751 = vmatprep.subr.mxu0 0.0
        %1752 = vmatpush1.msra.mxu0 0.0
        %1753 = vmatprep.subr.mxu0 0.0
        %1754 = vmatpush1.msra.mxu0 0.0
        %1755 = vmatprep.subr.mxu0 0.0
        %1756 = vmatpush1.msra.mxu0 0.0
        %1757 = vmatprep.subr.mxu0 0.0
        %1758 = vmatpush1.msra.mxu0 0.0
        %1759 = vmatprep.subr.mxu0 0.0
        %1760 = vmatpush1.msra.mxu0 0.0
        %1761 = vmatprep.subr.mxu0 0.0
        %1762 = vmatpush1.msra.mxu0 0.0
        %1763 = vmatprep.subr.mxu0 0.0
        %1764 = vmatpush1.msra.mxu0 0.0
        %1765 = vmatprep.subr.mxu0 0.0
        %1766 = vmatpush1.msra.mxu0 0.0
        %1767 = vmatprep.subr.mxu0 0.0
        %1768 = vmatpush1.msra.mxu0 0.0
        %1769 = vmatprep.mubr.f32.mxu0 0.0
        %v1770 = vand.u32 %v1510, 4294901760
        %1771 = vmatmul.mubr.f32.gmra.mrb[0].mxu0 %v1770
        %v1772 = vpop.f32.mrb[0].mxu0
        %v1773 = vadd.f32 %v1622, %v1772
        %v1774 = vpop.f32.mrb[0].mxu0
        %1775 = vdwg.mxu0
        %1776 = vmatprep.subr.mxu0 0.0
        %v1777 = vand.u32 %v1511, 4294901760
        %v1778 = vsub.f32 %v1511, %v1777
        %1779 = vmatpush1.msra.mxu0 %v1778
        %1780 = vmatprep.subr.mxu0 0.0
        %v1781 = vand.u32 %v1512, 4294901760
        %v1782 = vsub.f32 %v1512, %v1781
        %1783 = vmatpush1.msra.mxu0 %v1782
        %1784 = vmatprep.subr.mxu0 0.0
        %v1785 = vand.u32 %v1513, 4294901760
        %v1786 = vsub.f32 %v1513, %v1785
        %1787 = vmatpush1.msra.mxu0 %v1786
        %1788 = vmatprep.subr.mxu0 0.0
        %v1789 = vand.u32 %v1514, 4294901760
        %v1790 = vsub.f32 %v1514, %v1789
        %1791 = vmatpush1.msra.mxu0 %v1790
        %1792 = vmatprep.subr.mxu0 0.0
        %v1793 = vand.u32 %v1515, 4294901760
        %v1794 = vsub.f32 %v1515, %v1793
        %1795 = vmatpush1.msra.mxu0 %v1794
        %1796 = vmatprep.subr.mxu0 0.0
        %v1797 = vand.u32 %v1516, 4294901760
        %v1798 = vsub.f32 %v1516, %v1797
        %1799 = vmatpush1.msra.mxu0 %v1798
        %1800 = vmatprep.subr.mxu0 0.0
        %v1801 = vand.u32 %v1517, 4294901760
        %v1802 = vsub.f32 %v1517, %v1801
        %1803 = vmatpush1.msra.mxu0 %v1802
        %1804 = vmatprep.subr.mxu0 0.0
        %v1805 = vand.u32 %v1518, 4294901760
        %v1806 = vsub.f32 %v1518, %v1805
        %1807 = vmatpush1.msra.mxu0 %v1806
        %1808 = vmatprep.subr.mxu0 0.0
        %v1809 = vand.u32 %v1519, 4294901760
        %v1810 = vsub.f32 %v1519, %v1809
        %1811 = vmatpush1.msra.mxu0 %v1810
        %1812 = vmatprep.subr.mxu0 0.0
        %v1813 = vand.u32 %v1520, 4294901760
        %v1814 = vsub.f32 %v1520, %v1813
        %1815 = vmatpush1.msra.mxu0 %v1814
        %1816 = vmatprep.subr.mxu0 0.0
        %v1817 = vand.u32 %v1521, 4294901760
        %v1818 = vsub.f32 %v1521, %v1817
        %1819 = vmatpush1.msra.mxu0 %v1818
        %1820 = vmatprep.subr.mxu0 0.0
        %v1821 = vand.u32 %v1522, 4294901760
        %v1822 = vsub.f32 %v1522, %v1821
        %1823 = vmatpush1.msra.mxu0 %v1822
        %1824 = vmatprep.subr.mxu0 0.0
        %v1825 = vand.u32 %v1523, 4294901760
        %v1826 = vsub.f32 %v1523, %v1825
        %1827 = vmatpush1.msra.mxu0 %v1826
        %1828 = vmatprep.subr.mxu0 0.0
        %v1829 = vand.u32 %v1524, 4294901760
        %v1830 = vsub.f32 %v1524, %v1829
        %1831 = vmatpush1.msra.mxu0 %v1830
        %1832 = vmatprep.subr.mxu0 0.0
        %v1833 = vand.u32 %v1525, 4294901760
        %v1834 = vsub.f32 %v1525, %v1833
        %1835 = vmatpush1.msra.mxu0 %v1834
        %1836 = vmatprep.subr.mxu0 0.0
        %v1837 = vand.u32 %v1526, 4294901760
        %v1838 = vsub.f32 %v1526, %v1837
        %1839 = vmatpush1.msra.mxu0 %v1838
        %1840 = vmatprep.subr.mxu0 0.0
        %1841 = vmatpush1.msra.mxu0 0.0
        %1842 = vmatprep.subr.mxu0 0.0
        %1843 = vmatpush1.msra.mxu0 0.0
        %1844 = vmatprep.subr.mxu0 0.0
        %1845 = vmatpush1.msra.mxu0 0.0
        %1846 = vmatprep.subr.mxu0 0.0
        %1847 = vmatpush1.msra.mxu0 0.0
        %1848 = vmatprep.subr.mxu0 0.0
        %1849 = vmatpush1.msra.mxu0 0.0
        %1850 = vmatprep.subr.mxu0 0.0
        %1851 = vmatpush1.msra.mxu0 0.0
        %1852 = vmatprep.subr.mxu0 0.0
        %1853 = vmatpush1.msra.mxu0 0.0
        %1854 = vmatprep.subr.mxu0 0.0
        %1855 = vmatpush1.msra.mxu0 0.0
        %1856 = vmatprep.subr.mxu0 0.0
        %1857 = vmatpush1.msra.mxu0 0.0
        %1858 = vmatprep.subr.mxu0 0.0
        %1859 = vmatpush1.msra.mxu0 0.0
        %1860 = vmatprep.subr.mxu0 0.0
        %1861 = vmatpush1.msra.mxu0 0.0
        %1862 = vmatprep.subr.mxu0 0.0
        %1863 = vmatpush1.msra.mxu0 0.0
        %1864 = vmatprep.subr.mxu0 0.0
        %1865 = vmatpush1.msra.mxu0 0.0
        %1866 = vmatprep.subr.mxu0 0.0
        %1867 = vmatpush1.msra.mxu0 0.0
        %1868 = vmatprep.subr.mxu0 0.0
        %1869 = vmatpush1.msra.mxu0 0.0
        %1870 = vmatprep.subr.mxu0 0.0
        %1871 = vmatpush1.msra.mxu0 0.0
        %1872 = vmatprep.mubr.f32.mxu0 0.0
        %v1873 = vand.u32 %v1510, 4294901760
        %v1874 = vsub.f32 %v1510, %v1873
        %1875 = vmatmul.mubr.f32.gmra.mrb[0].mxu0 %v1874
        %v1876 = vpop.f32.mrb[0].mxu0
        %v1877 = vadd.f32 %v1773, %v1876
        %v1878 = vpop.f32.mrb[0].mxu0
        %1879 = vdwg.mxu0
        %1880 = vmatprep.subr.mxu0 0.0
        %v1881 = vand.u32 %v1511, 4294901760
        %1882 = vmatpush1.msra.mxu0 %v1881
        %1883 = vmatprep.subr.mxu0 0.0
        %v1884 = vand.u32 %v1512, 4294901760
        %1885 = vmatpush1.msra.mxu0 %v1884
        %1886 = vmatprep.subr.mxu0 0.0
        %v1887 = vand.u32 %v1513, 4294901760
        %1888 = vmatpush1.msra.mxu0 %v1887
        %1889 = vmatprep.subr.mxu0 0.0
        %v1890 = vand.u32 %v1514, 4294901760
        %1891 = vmatpush1.msra.mxu0 %v1890
        %1892 = vmatprep.subr.mxu0 0.0
        %v1893 = vand.u32 %v1515, 4294901760
        %1894 = vmatpush1.msra.mxu0 %v1893
        %1895 = vmatprep.subr.mxu0 0.0
        %v1896 = vand.u32 %v1516, 4294901760
        %1897 = vmatpush1.msra.mxu0 %v1896
        %1898 = vmatprep.subr.mxu0 0.0
        %v1899 = vand.u32 %v1517, 4294901760
        %1900 = vmatpush1.msra.mxu0 %v1899
        %1901 = vmatprep.subr.mxu0 0.0
        %v1902 = vand.u32 %v1518, 4294901760
        %1903 = vmatpush1.msra.mxu0 %v1902
        %1904 = vmatprep.subr.mxu0 0.0
        %v1905 = vand.u32 %v1519, 4294901760
        %1906 = vmatpush1.msra.mxu0 %v1905
        %1907 = vmatprep.subr.mxu0 0.0
        %v1908 = vand.u32 %v1520, 4294901760
        %1909 = vmatpush1.msra.mxu0 %v1908
        %1910 = vmatprep.subr.mxu0 0.0
        %v1911 = vand.u32 %v1521, 4294901760
        %1912 = vmatpush1.msra.mxu0 %v1911
        %1913 = vmatprep.subr.mxu0 0.0
        %v1914 = vand.u32 %v1522, 4294901760
        %1915 = vmatpush1.msra.mxu0 %v1914
        %1916 = vmatprep.subr.mxu0 0.0
        %v1917 = vand.u32 %v1523, 4294901760
        %1918 = vmatpush1.msra.mxu0 %v1917
        %1919 = vmatprep.subr.mxu0 0.0
        %v1920 = vand.u32 %v1524, 4294901760
        %1921 = vmatpush1.msra.mxu0 %v1920
        %1922 = vmatprep.subr.mxu0 0.0
        %v1923 = vand.u32 %v1525, 4294901760
        %1924 = vmatpush1.msra.mxu0 %v1923
        %1925 = vmatprep.subr.mxu0 0.0
        %v1926 = vand.u32 %v1526, 4294901760
        %1927 = vmatpush1.msra.mxu0 %v1926
        %1928 = vmatprep.subr.mxu0 0.0
        %1929 = vmatpush1.msra.mxu0 0.0
        %1930 = vmatprep.subr.mxu0 0.0
        %1931 = vmatpush1.msra.mxu0 0.0
        %1932 = vmatprep.subr.mxu0 0.0
        %1933 = vmatpush1.msra.mxu0 0.0
        %1934 = vmatprep.subr.mxu0 0.0
        %1935 = vmatpush1.msra.mxu0 0.0
        %1936 = vmatprep.subr.mxu0 0.0
        %1937 = vmatpush1.msra.mxu0 0.0
        %1938 = vmatprep.subr.mxu0 0.0
        %1939 = vmatpush1.msra.mxu0 0.0
        %1940 = vmatprep.subr.mxu0 0.0
        %1941 = vmatpush1.msra.mxu0 0.0
        %1942 = vmatprep.subr.mxu0 0.0
        %1943 = vmatpush1.msra.mxu0 0.0
        %1944 = vmatprep.subr.mxu0 0.0
        %1945 = vmatpush1.msra.mxu0 0.0
        %1946 = vmatprep.subr.mxu0 0.0
        %1947 = vmatpush1.msra.mxu0 0.0
        %1948 = vmatprep.subr.mxu0 0.0
        %1949 = vmatpush1.msra.mxu0 0.0
        %1950 = vmatprep.subr.mxu0 0.0
        %1951 = vmatpush1.msra.mxu0 0.0
        %1952 = vmatprep.subr.mxu0 0.0
        %1953 = vmatpush1.msra.mxu0 0.0
        %1954 = vmatprep.subr.mxu0 0.0
        %1955 = vmatpush1.msra.mxu0 0.0
        %1956 = vmatprep.subr.mxu0 0.0
        %1957 = vmatpush1.msra.mxu0 0.0
        %1958 = vmatprep.subr.mxu0 0.0
        %1959 = vmatpush1.msra.mxu0 0.0
        %1960 = vmatprep.mubr.f32.mxu0 0.0
        %v1961 = vand.u32 %v1510, 4294901760
        %v1962 = vsub.f32 %v1510, %v1961
        %v1963 = vand.u32 %v1962, 4294901760
        %1964 = vmatmul.mubr.f32.gmra.mrb[0].mxu0 %v1963
        %v1965 = vpop.f32.mrb[0].mxu0
        %v1966 = vadd.f32 %v1877, %v1965
        %v1967 = vpop.f32.mrb[0].mxu0
        %1968 = vdwg.mxu0
        %1969 = vmatprep.subr.mxu0 0.0
        %v1970 = vand.u32 %v1511, 4294901760
        %v1971 = vsub.f32 %v1511, %v1970
        %v1972 = vand.u32 %v1971, 4294901760
        %1973 = vmatpush1.msra.mxu0 %v1972
        %1974 = vmatprep.subr.mxu0 0.0
        %v1975 = vand.u32 %v1512, 4294901760
        %v1976 = vsub.f32 %v1512, %v1975
        %v1977 = vand.u32 %v1976, 4294901760
        %1978 = vmatpush1.msra.mxu0 %v1977
        %1979 = vmatprep.subr.mxu0 0.0
        %v1980 = vand.u32 %v1513, 4294901760
        %v1981 = vsub.f32 %v1513, %v1980
        %v1982 = vand.u32 %v1981, 4294901760
        %1983 = vmatpush1.msra.mxu0 %v1982
        %1984 = vmatprep.subr.mxu0 0.0
        %v1985 = vand.u32 %v1514, 4294901760
        %v1986 = vsub.f32 %v1514, %v1985
        %v1987 = vand.u32 %v1986, 4294901760
        %1988 = vmatpush1.msra.mxu0 %v1987
        %1989 = vmatprep.subr.mxu0 0.0
        %v1990 = vand.u32 %v1515, 4294901760
        %v1991 = vsub.f32 %v1515, %v1990
        %v1992 = vand.u32 %v1991, 4294901760
        %1993 = vmatpush1.msra.mxu0 %v1992
        %1994 = vmatprep.subr.mxu0 0.0
        %v1995 = vand.u32 %v1516, 4294901760
        %v1996 = vsub.f32 %v1516, %v1995
        %v1997 = vand.u32 %v1996, 4294901760
        %1998 = vmatpush1.msra.mxu0 %v1997
        %1999 = vmatprep.subr.mxu0 0.0
        %v2000 = vand.u32 %v1517, 4294901760
        %v2001 = vsub.f32 %v1517, %v2000
        %v2002 = vand.u32 %v2001, 4294901760
        %2003 = vmatpush1.msra.mxu0 %v2002
        %2004 = vmatprep.subr.mxu0 0.0
        %v2005 = vand.u32 %v1518, 4294901760
        %v2006 = vsub.f32 %v1518, %v2005
        %v2007 = vand.u32 %v2006, 4294901760
        %2008 = vmatpush1.msra.mxu0 %v2007
        %2009 = vmatprep.subr.mxu0 0.0
        %v2010 = vand.u32 %v1519, 4294901760
        %v2011 = vsub.f32 %v1519, %v2010
        %v2012 = vand.u32 %v2011, 4294901760
        %2013 = vmatpush1.msra.mxu0 %v2012
        %2014 = vmatprep.subr.mxu0 0.0
        %v2015 = vand.u32 %v1520, 4294901760
        %v2016 = vsub.f32 %v1520, %v2015
        %v2017 = vand.u32 %v2016, 4294901760
        %2018 = vmatpush1.msra.mxu0 %v2017
        %2019 = vmatprep.subr.mxu0 0.0
        %v2020 = vand.u32 %v1521, 4294901760
        %v2021 = vsub.f32 %v1521, %v2020
        %v2022 = vand.u32 %v2021, 4294901760
        %2023 = vmatpush1.msra.mxu0 %v2022
        %2024 = vmatprep.subr.mxu0 0.0
        %v2025 = vand.u32 %v1522, 4294901760
        %v2026 = vsub.f32 %v1522, %v2025
        %v2027 = vand.u32 %v2026, 4294901760
        %2028 = vmatpush1.msra.mxu0 %v2027
        %2029 = vmatprep.subr.mxu0 0.0
        %v2030 = vand.u32 %v1523, 4294901760
        %v2031 = vsub.f32 %v1523, %v2030
        %v2032 = vand.u32 %v2031, 4294901760
        %2033 = vmatpush1.msra.mxu0 %v2032
        %2034 = vmatprep.subr.mxu0 0.0
        %v2035 = vand.u32 %v1524, 4294901760
        %v2036 = vsub.f32 %v1524, %v2035
        %v2037 = vand.u32 %v2036, 4294901760
        %2038 = vmatpush1.msra.mxu0 %v2037
        %2039 = vmatprep.subr.mxu0 0.0
        %v2040 = vand.u32 %v1525, 4294901760
        %v2041 = vsub.f32 %v1525, %v2040
        %v2042 = vand.u32 %v2041, 4294901760
        %2043 = vmatpush1.msra.mxu0 %v2042
        %2044 = vmatprep.subr.mxu0 0.0
        %v2045 = vand.u32 %v1526, 4294901760
        %v2046 = vsub.f32 %v1526, %v2045
        %v2047 = vand.u32 %v2046, 4294901760
        %2048 = vmatpush1.msra.mxu0 %v2047
        %2049 = vmatprep.subr.mxu0 0.0
        %2050 = vmatpush1.msra.mxu0 0.0
        %2051 = vmatprep.subr.mxu0 0.0
        %2052 = vmatpush1.msra.mxu0 0.0
        %2053 = vmatprep.subr.mxu0 0.0
        %2054 = vmatpush1.msra.mxu0 0.0
        %2055 = vmatprep.subr.mxu0 0.0
        %2056 = vmatpush1.msra.mxu0 0.0
        %2057 = vmatprep.subr.mxu0 0.0
        %2058 = vmatpush1.msra.mxu0 0.0
        %2059 = vmatprep.subr.mxu0 0.0
        %2060 = vmatpush1.msra.mxu0 0.0
        %2061 = vmatprep.subr.mxu0 0.0
        %2062 = vmatpush1.msra.mxu0 0.0
        %2063 = vmatprep.subr.mxu0 0.0
        %2064 = vmatpush1.msra.mxu0 0.0
        %2065 = vmatprep.subr.mxu0 0.0
        %2066 = vmatpush1.msra.mxu0 0.0
        %2067 = vmatprep.subr.mxu0 0.0
        %2068 = vmatpush1.msra.mxu0 0.0
        %2069 = vmatprep.subr.mxu0 0.0
        %2070 = vmatpush1.msra.mxu0 0.0
        %2071 = vmatprep.subr.mxu0 0.0
        %2072 = vmatpush1.msra.mxu0 0.0
        %2073 = vmatprep.subr.mxu0 0.0
        %2074 = vmatpush1.msra.mxu0 0.0
        %2075 = vmatprep.subr.mxu0 0.0
        %2076 = vmatpush1.msra.mxu0 0.0
        %2077 = vmatprep.subr.mxu0 0.0
        %2078 = vmatpush1.msra.mxu0 0.0
        %2079 = vmatprep.subr.mxu0 0.0
        %2080 = vmatpush1.msra.mxu0 0.0
        %2081 = vmatprep.mubr.f32.mxu0 0.0
        %v2082 = vand.u32 %v1510, 4294901760
        %2083 = vmatmul.mubr.f32.gmra.mrb[0].mxu0 %v2082
        %v2084 = vpop.f32.mrb[0].mxu0
        %v2085 = vadd.f32 %v1966, %v2084
        %v2086 = vpop.f32.mrb[0].mxu0
        %2087 = vdwg.mxu0
        %2088 = vmatprep.subr.mxu0 0.0
        %v2089 = vand.u32 %v1511, 4294901760
        %2090 = vmatpush1.msra.mxu0 %v2089
        %2091 = vmatprep.subr.mxu0 0.0
        %v2092 = vand.u32 %v1512, 4294901760
        %2093 = vmatpush1.msra.mxu0 %v2092
        %2094 = vmatprep.subr.mxu0 0.0
        %v2095 = vand.u32 %v1513, 4294901760
        %2096 = vmatpush1.msra.mxu0 %v2095
        %2097 = vmatprep.subr.mxu0 0.0
        %v2098 = vand.u32 %v1514, 4294901760
        %2099 = vmatpush1.msra.mxu0 %v2098
        %2100 = vmatprep.subr.mxu0 0.0
        %v2101 = vand.u32 %v1515, 4294901760
        %2102 = vmatpush1.msra.mxu0 %v2101
        %2103 = vmatprep.subr.mxu0 0.0
        %v2104 = vand.u32 %v1516, 4294901760
        %2105 = vmatpush1.msra.mxu0 %v2104
        %2106 = vmatprep.subr.mxu0 0.0
        %v2107 = vand.u32 %v1517, 4294901760
        %2108 = vmatpush1.msra.mxu0 %v2107
        %2109 = vmatprep.subr.mxu0 0.0
        %v2110 = vand.u32 %v1518, 4294901760
        %2111 = vmatpush1.msra.mxu0 %v2110
        %2112 = vmatprep.subr.mxu0 0.0
        %v2113 = vand.u32 %v1519, 4294901760
        %2114 = vmatpush1.msra.mxu0 %v2113
        %2115 = vmatprep.subr.mxu0 0.0
        %v2116 = vand.u32 %v1520, 4294901760
        %2117 = vmatpush1.msra.mxu0 %v2116
        %2118 = vmatprep.subr.mxu0 0.0
        %v2119 = vand.u32 %v1521, 4294901760
        %2120 = vmatpush1.msra.mxu0 %v2119
        %2121 = vmatprep.subr.mxu0 0.0
        %v2122 = vand.u32 %v1522, 4294901760
        %2123 = vmatpush1.msra.mxu0 %v2122
        %2124 = vmatprep.subr.mxu0 0.0
        %v2125 = vand.u32 %v1523, 4294901760
        %2126 = vmatpush1.msra.mxu0 %v2125
        %2127 = vmatprep.subr.mxu0 0.0
        %v2128 = vand.u32 %v1524, 4294901760
        %2129 = vmatpush1.msra.mxu0 %v2128
        %2130 = vmatprep.subr.mxu0 0.0
        %v2131 = vand.u32 %v1525, 4294901760
        %2132 = vmatpush1.msra.mxu0 %v2131
        %2133 = vmatprep.subr.mxu0 0.0
        %v2134 = vand.u32 %v1526, 4294901760
        %2135 = vmatpush1.msra.mxu0 %v2134
        %2136 = vmatprep.subr.mxu0 0.0
        %2137 = vmatpush1.msra.mxu0 0.0
        %2138 = vmatprep.subr.mxu0 0.0
        %2139 = vmatpush1.msra.mxu0 0.0
        %2140 = vmatprep.subr.mxu0 0.0
        %2141 = vmatpush1.msra.mxu0 0.0
        %2142 = vmatprep.subr.mxu0 0.0
        %2143 = vmatpush1.msra.mxu0 0.0
        %2144 = vmatprep.subr.mxu0 0.0
        %2145 = vmatpush1.msra.mxu0 0.0
        %2146 = vmatprep.subr.mxu0 0.0
        %2147 = vmatpush1.msra.mxu0 0.0
        %2148 = vmatprep.subr.mxu0 0.0
        %2149 = vmatpush1.msra.mxu0 0.0
        %2150 = vmatprep.subr.mxu0 0.0
        %2151 = vmatpush1.msra.mxu0 0.0
        %2152 = vmatprep.subr.mxu0 0.0
        %2153 = vmatpush1.msra.mxu0 0.0
        %2154 = vmatprep.subr.mxu0 0.0
        %2155 = vmatpush1.msra.mxu0 0.0
        %2156 = vmatprep.subr.mxu0 0.0
        %2157 = vmatpush1.msra.mxu0 0.0
        %2158 = vmatprep.subr.mxu0 0.0
        %2159 = vmatpush1.msra.mxu0 0.0
        %2160 = vmatprep.subr.mxu0 0.0
        %2161 = vmatpush1.msra.mxu0 0.0
        %2162 = vmatprep.subr.mxu0 0.0
        %2163 = vmatpush1.msra.mxu0 0.0
        %2164 = vmatprep.subr.mxu0 0.0
        %2165 = vmatpush1.msra.mxu0 0.0
        %2166 = vmatprep.subr.mxu0 0.0
        %2167 = vmatpush1.msra.mxu0 0.0
        %2168 = vmatprep.mubr.f32.mxu0 0.0
        %v2169 = vand.u32 %v1510, 4294901760
        %2170 = vmatmul.mubr.f32.gmra.mrb[0].mxu0 %v2169
        %v2171 = vpop.f32.mrb[0].mxu0
        %v2172 = vadd.f32 %v2085, %v2171
        %v2173 = vpop.f32.mrb[0].mxu0
        %2174 = vdwg.mxu0
        %2175 = vst.msk [vmem:[%s336] sm:$0xff] %vm362, %v2172
        %s2176 = sand.u32 %s230, 1
        %s2177 = scalar_lea.sflag [#allocation3], %s2176
        %s2178 = sand.u32 %s230, 1
        %s2179 = smul.addr %s2178, 8
        %s2180 = scalar_lea.vmem [#allocation2], %s2179
        // Predicated region
        $region57: #{tpu_custom_call.1} parent=55 // pred_check
          %p2181 = pneg %p240
        $region58: #{tpu_custom_call.1} parent=55 // pred_check_branch
          %2183 = sbr.rel (%p2181) target = $region60
        $region59: #{tpu_custom_call.1} parent=55 // pred_region
          %s2185 = ssub.s32 128, 128
          %2186 = vsyncadd %s2177, %s2185
          %s2187 = smul.addr %s23, 128
          %s2188 = scalar_lea.hbm %s9, %s2187
          %s2190 = sshll.u32 %s2180, 4
          %s2191 = int_to_ptr.vmem [resolvable:$true] %s2190
          %2193 = dma.vmem_to_hbm [thread:$0]  %s2191, 128, %s2188, %s2177
        $region60: #{tpu_custom_call.1} parent=55 // pred_fallthru
          _
      $region56: #{tpu_custom_call.1} parent=5 // pred_fallthru
        _
      %p2194 = scmp.le.s32.totalorder 2, %s18
      // Predicated region
      $region61: #{tpu_custom_call.1} parent=5 // pred_check
        %p2195 = pneg %p2194
      $region62: #{tpu_custom_call.1} parent=5 // pred_check_branch
        %2197 = sbr.rel (%p2195) target = $region64
      $region63: #{tpu_custom_call.1} parent=5 // pred_region
        %s2198 = ssub.s32 %s18, 2
        // Predicated region
        $region65: #{tpu_custom_call.1} parent=63 // pred_check
          %p2199 = pneg %p246
        $region66: #{tpu_custom_call.1} parent=63 // pred_check_branch
          %2201 = sbr.rel (%p2199) target = $region68
        $region67: #{tpu_custom_call.1} parent=63 // pred_region
          %s2202 = sand.u32 %s231, 1
          %s2203 = scalar_lea.sflag [#allocation3], %s2202
          %s2204 = sand.u32 %s231, 1
          %s2205 = smul.addr %s2204, 8
          %s2206 = scalar_lea.vmem [#allocation2], %s2205
          %2207 = dma.done %s2203, 128
        $region68: #{tpu_custom_call.1} parent=63 // pred_fallthru
          _
      $region64: #{tpu_custom_call.1} parent=5 // pred_fallthru
        _
    $region6: #{tpu_custom_call.1} parent=1 // loop_footer
      %s22 = sadd.s32 1, %s18
    $region7: #{tpu_custom_call.1} parent=1 // loop_footer_branch
      %17 = sbr.rel target = $region3
    $region8: #{tpu_custom_call.1} parent=1 // loop_exit
      _
    %2208 = vsyncpa [#allocation3], 1
    %s2209 = scalar_lea.sflag [#allocation3], 1
    %2210 = vsyncpa %s2209, 1

</llo_original>
